<compile_context>
chip_gen: v7x
topology: tpu7x:2x2x1
jax: 0.10.0
libtpu: 0.0.40
codegen_flags: <defaults>
</compile_context>

<pallas_src>
import jax
import jax.numpy as jnp
import numpy as np
from jax import lax
from jax.experimental import pallas as pl
from jax.experimental.pallas import tpu as pltpu

# ----------------------------- model config -----------------------------
INPUT_DIM = 16        # vocab size
EMBEDDING_SIZE = 32
HIDDEN_DIM = 32
CELL_TYPE = "GRU"     # implemented cell
NUM_LAYERS = 1
BIDIRECTIONAL = False
# TODO(synk): inter-layer RNN dropout is a no-op for num_layers=1 (and in eval); not implemented.

SEQ_LEN = 8
BATCH = 8
PACK = 128            # lane-packed gate width: [r | z | n | pad]; 3*H = 96 -> pad to 128


def _encoder_kernel(ids_ref, table_ref, whh_ref, bhn_ref, h_out_ref):
    """Whole encoder forward in one invocation.

    ids_ref  : (S*B, 1) int32    flattened token ids (time-major)
    table_ref: (V, PACK) f32     per-token lookup table
                                 [emb@W_ir^T+b_ir+b_hr | emb@W_iz^T+b_iz+b_hz |
                                  emb@W_in^T+b_in | 0]
    whh_ref  : (H, PACK) f32     packed recurrent weights [W_hr^T | W_hz^T | W_hn^T | 0]
    bhn_ref  : (1, PACK) f32     [0 | 0 | b_hn | 0]   (b_hn is scaled by r -> kept separate)
    h_out_ref: (1, B, H) f32     final hidden state
    """
    SB = ids_ref.shape[0]
    V = table_ref.shape[0]
    B = h_out_ref.shape[1]
    H = h_out_ref.shape[2]
    S = SB // B
    W = table_ref.shape[1]                                      # packed lane width (128)

    # ---- prologue: fused embedding + input projection + bias, ONE matmul ----
    ids = ids_ref[...]                                          # (S*B, 1) int32
    vocab_iota = lax.broadcasted_iota(jnp.int32, (SB, V), 1)
    one_hot = (ids == vocab_iota).astype(jnp.float32)           # exact {0,1}
    gi_all = jnp.dot(one_hot, table_ref[...],
                     preferred_element_type=jnp.float32)        # (S*B, PACK), r|z|n|0 packed

    # ---- loop invariants hoisted out of the unrolled recurrence -------------
    whh = whh_ref[...]                                          # (H, PACK)
    bhn_b = jnp.broadcast_to(bhn_ref[...], (B, W))              # broadcast ONCE, not per step
    # Exact 0/1 selection matrix: (act @ z_sel)[:, j] == act[:, H + j], i.e. it
    # moves the z lanes [H:2H] down to [0:H].  Uses the (idle) MXU off the
    # h -> r -> n critical path and avoids a non-self-inverse lane rotate.
    row = lax.broadcasted_iota(jnp.int32, (W, H), 0)
    col = lax.broadcasted_iota(jnp.int32, (W, H), 1)
    z_sel = (row == col + H).astype(jnp.float32)                # (PACK, H)

    # ---- fully unrolled recurrence (static slices, value-resident gi) -------
    h = jnp.zeros((B, H), jnp.float32)
    for t in range(S):
        gi_t = gi_all[t * B:(t + 1) * B, :]                     # (B, PACK) static sublane slice
        gh = jnp.dot(h, whh, preferred_element_type=jnp.float32)  # ONE packed MXU matmul
        act = jax.nn.sigmoid(gi_t + gh)                         # ONE sigmoid: r@[0:H], z@[H:2H]
        r_at_n = pltpu.roll(act, shift=2 * H, axis=1)           # r -> lanes [2H:3H] (XLU, 64-shift)
        n_full = jnp.tanh(gi_t + r_at_n * (gh + bhn_b))         # n @ [2H:3H]
        n0 = pltpu.roll(n_full, shift=2 * H, axis=1)[:, :H]     # n -> lanes [0:H]
        z0 = jnp.dot(act, z_sel, preferred_element_type=jnp.float32)  # exact z @ [0:H]
        h = (1.0 - z0) * n0 + z0 * h                            # (B, H)

    h_out_ref[0] = h


def encoder_forward(x_tokens, params):
    """x_tokens: (seq_len, batch) int token ids. Returns (1, batch, hidden_dim)."""
    S, B = x_tokens.shape
    H = HIDDEN_DIM
    ids = x_tokens.reshape(S * B, 1).astype(jnp.int32)   # trivial int reshape; no gather

    # NOTE(v7x): with a larger batch / many sequences per call, add a leading
    # grid axis over batch tiles with dimension_semantics=("parallel",) so the
    # second TensorCore is used; at B=8 one gridless invocation is best.
    # NOTE: matmuls kept in f32 — this workload is latency-bound and the 1e-5
    # check against the f32 reference would not survive bf16 weights.
    return pl.pallas_call(
        _encoder_kernel,
        out_shape=jax.ShapeDtypeStruct((1, B, H), jnp.float32),
        in_specs=[pl.BlockSpec(memory_space=pltpu.MemorySpace.VMEM)] * 4,
        out_specs=pl.BlockSpec(memory_space=pltpu.MemorySpace.VMEM),
        # Advisory cost so XLA schedules neighbouring ops around this micro-kernel.
        cost_estimate=pl.CostEstimate(flops=1_500_000, transcendentals=16_384,
                                      bytes_accessed=27_000),
    )(ids, params["table_rzn"], params["w_hh_cat"], params["b_hn_row"])


def init_params(key):
    """PyTorch-shaped init (uniform +/- 1/sqrt(H)), plus kernel-friendly layouts."""
    k_emb, k_wih, k_whh, k_bih, k_bhh = jax.random.split(key, 5)
    H, E, V = HIDDEN_DIM, EMBEDDING_SIZE, INPUT_DIM
    bound = 1.0 / np.sqrt(H)
    emb = jax.random.normal(k_emb, (V, E), jnp.float32)
    w_ih = jax.random.uniform(k_wih, (3 * H, E), jnp.float32, -bound, bound)
    w_hh = jax.random.uniform(k_whh, (3 * H, H), jnp.float32, -bound, bound)
    b_ih = jax.random.uniform(k_bih, (3 * H,), jnp.float32, -bound, bound)
    b_hh = jax.random.uniform(k_bhh, (3 * H,), jnp.float32, -bound, bound)

    # ---- kernel layouts (gate order r, z, n; lane-packed, padded to PACK) ----
    w_ih_g = w_ih.reshape(3, H, E)
    w_hh_g = w_hh.reshape(3, H, H)
    b_i = b_ih.reshape(3, H)
    b_h = b_hh.reshape(3, H)
    pad_v = jnp.zeros((V, PACK - 3 * H), jnp.float32)
    pad_h = jnp.zeros((H, PACK - 3 * H), jnp.float32)

    # Per-token lookup table: embedding x input-projection + biases folded once
    # (exact identity). b_hr / b_hz fold in; b_hn stays separate (scaled by r).
    table_rzn = jnp.concatenate(
        [emb @ w_ih_g[0].T + b_i[0] + b_h[0],
         emb @ w_ih_g[1].T + b_i[1] + b_h[1],
         emb @ w_ih_g[2].T + b_i[2],
         pad_v], axis=1)                                              # (V, PACK)

    w_hh_cat = jnp.concatenate(
        [w_hh_g[0].T, w_hh_g[1].T, w_hh_g[2].T, pad_h], axis=1)       # (H, PACK)

    b_hn_row = jnp.concatenate(
        [jnp.zeros((1, 2 * H), jnp.float32), b_h[2][None, :],
         jnp.zeros((1, PACK - 3 * H), jnp.float32)], axis=1)          # (1, PACK)

    return {
        # kernel-layout params
        "table_rzn": table_rzn, "w_hh_cat": w_hh_cat, "b_hn_row": b_hn_row,
        # raw PyTorch-layout params (for the pure-JAX reference)
        "embedding": emb, "w_ih": w_ih, "w_hh": w_hh, "b_ih": b_ih, "b_hh": b_hh,
    }


def _reference_forward(x_tokens, params):
    """Pure-JAX GRU reference matching PyTorch nn.GRU semantics."""
    H = HIDDEN_DIM
    embedded = jnp.take(params["embedding"], x_tokens, axis=0)   # (S, B, E)
    w_ih_t = params["w_ih"].T
    w_hh_t = params["w_hh"].T
    b_ih = params["b_ih"][None, :]
    b_hh = params["b_hh"][None, :]

    def step(h, x_t):
        gi = x_t @ w_ih_t + b_ih
        gh = h @ w_hh_t + b_hh
        i_r, i_z, i_n = gi[:, :H], gi[:, H:2 * H], gi[:, 2 * H:]
        h_r, h_z, h_n = gh[:, :H], gh[:, H:2 * H], gh[:, 2 * H:]
        r = jax.nn.sigmoid(i_r + h_r)
        z = jax.nn.sigmoid(i_z + h_z)
        n = jnp.tanh(i_n + r * h_n)
        return (1.0 - z) * n + z * h, None

    h0 = jnp.zeros((x_tokens.shape[1], H), jnp.float32)
    h_final, _ = lax.scan(step, h0, embedded)
    return h_final[None]


if __name__ == "__main__":
    key = jax.random.PRNGKey(0)
    k_params, k_x = jax.random.split(key)
    params = init_params(k_params)

    x = jax.random.randint(k_x, (SEQ_LEN, BATCH), 0, INPUT_DIM, dtype=jnp.int32)

    hidden = encoder_forward(x, params)
    hidden = jax.block_until_ready(hidden)

    ref = jax.block_until_ready(_reference_forward(x, params))
    np.testing.assert_allclose(np.asarray(hidden), np.asarray(ref), rtol=1e-5, atol=1e-5)

    assert hidden.shape == (NUM_LAYERS * (2 if BIDIRECTIONAL else 1), BATCH, HIDDEN_DIM)
    print("KERNEL_OK")
</pallas_src>

<mosaic_0001>
module attributes {stable_mosaic.version = 11 : i64} {
  func.func @_encoder_kernel(%arg0: memref<64x1xi32, #tpu.memory_space<vmem>>, %arg1: memref<16x128xf32, #tpu.memory_space<vmem>>, %arg2: memref<32x128xf32, #tpu.memory_space<vmem>>, %arg3: memref<1x128xf32, #tpu.memory_space<vmem>>, %arg4: memref<1x8x32xf32, #tpu.memory_space<vmem>>) attributes {dimension_semantics = [], scalar_prefetch = 0 : i64, scratch_operands = 0 : i64, tpu.core_type = #tpu.core_type<tc>} {
    %c0 = arith.constant 0 : index
    %c0_0 = arith.constant 0 : index
    %0 = vector.load %arg0[%c0, %c0_0] : memref<64x1xi32, #tpu.memory_space<vmem>>, vector<64x1xi32>
    %1 = tpu.iota {dimensions = array<i32: 1>} : vector<64x16xi32>
    %2 = vector.broadcast %0 : vector<64x1xi32> to vector<64x16xi32>
    %3 = arith.cmpi eq, %2, %1 : vector<64x16xi32>
    %4 = arith.extui %3 : vector<64x16xi1> to vector<64x16xi32>
    %5 = arith.sitofp %4 : vector<64x16xi32> to vector<64x16xf32>
    %c0_1 = arith.constant 0 : index
    %c0_2 = arith.constant 0 : index
    %6 = vector.load %arg1[%c0_1, %c0_2] : memref<16x128xf32, #tpu.memory_space<vmem>>, vector<16x128xf32>
    %cst = arith.constant dense<0.000000e+00> : vector<64x128xf32>
    %7 = tpu.matmul %5, %6, %cst {dimension_numbers = #tpu.dot_dimension_numbers<[1], [0], [0], [1], [0, 0, 1, 1], [], []>} : vector<64x16xf32>, vector<16x128xf32>, vector<64x128xf32> -> vector<64x128xf32>
    %c0_3 = arith.constant 0 : index
    %c0_4 = arith.constant 0 : index
    %8 = vector.load %arg2[%c0_3, %c0_4] : memref<32x128xf32, #tpu.memory_space<vmem>>, vector<32x128xf32>
    %c0_5 = arith.constant 0 : index
    %c0_6 = arith.constant 0 : index
    %9 = vector.load %arg3[%c0_5, %c0_6] : memref<1x128xf32, #tpu.memory_space<vmem>>, vector<1x128xf32>
    %10 = vector.shape_cast %9 : vector<1x128xf32> to vector<1x128xf32>
    %11 = vector.broadcast %10 : vector<1x128xf32> to vector<8x128xf32>
    %12 = tpu.iota {dimensions = array<i32: 0>} : vector<128x32xi32>
    %13 = tpu.iota {dimensions = array<i32: 1>} : vector<128x32xi32>
    %c32_i32 = arith.constant 32 : i32
    %14 = vector.broadcast %c32_i32 : i32 to vector<128x32xi32>
    %15 = arith.addi %13, %14 : vector<128x32xi32>
    %16 = arith.cmpi eq, %12, %15 : vector<128x32xi32>
    %17 = arith.extui %16 : vector<128x32xi1> to vector<128x32xi32>
    %18 = arith.sitofp %17 : vector<128x32xi32> to vector<128x32xf32>
    %cst_7 = arith.constant 0.000000e+00 : f32
    %19 = vector.broadcast %cst_7 : f32 to vector<8x32xf32>
    %20 = vector.extract_strided_slice %7 {offsets = [0, 0], sizes = [8, 128], strides = [1, 1]} : vector<64x128xf32> to vector<8x128xf32>
    %cst_8 = arith.constant dense<0.000000e+00> : vector<8x128xf32>
    %21 = tpu.matmul %19, %8, %cst_8 {dimension_numbers = #tpu.dot_dimension_numbers<[1], [0], [0], [1], [0, 0, 1, 1], [], []>} : vector<8x32xf32>, vector<32x128xf32>, vector<8x128xf32> -> vector<8x128xf32>
    %22 = arith.addf %20, %21 : vector<8x128xf32>
    %23 = arith.negf %22 : vector<8x128xf32>
    %24 = math.exp %23 : vector<8x128xf32>
    %cst_9 = arith.constant 1.000000e+00 : f32
    %25 = vector.broadcast %cst_9 : f32 to vector<8x128xf32>
    %26 = arith.addf %25, %24 : vector<8x128xf32>
    %27 = arith.divf %25, %26 : vector<8x128xf32>
    %c64_i32 = arith.constant 64 : i32
    %28 = tpu.dynamic_rotate %27 by %c64_i32 dim 1 : vector<8x128xf32>, i32 -> vector<8x128xf32>
    %29 = arith.addf %21, %11 : vector<8x128xf32>
    %30 = arith.mulf %28, %29 : vector<8x128xf32>
    %31 = arith.addf %20, %30 : vector<8x128xf32>
    %32 = math.tanh %31 : vector<8x128xf32>
    %c64_i32_10 = arith.constant 64 : i32
    %33 = tpu.dynamic_rotate %32 by %c64_i32_10 dim 1 : vector<8x128xf32>, i32 -> vector<8x128xf32>
    %34 = vector.extract_strided_slice %33 {offsets = [0, 0], sizes = [8, 32], strides = [1, 1]} : vector<8x128xf32> to vector<8x32xf32>
    %cst_11 = arith.constant dense<0.000000e+00> : vector<8x32xf32>
    %35 = tpu.matmul %27, %18, %cst_11 {dimension_numbers = #tpu.dot_dimension_numbers<[1], [0], [0], [1], [0, 0, 1, 1], [], []>} : vector<8x128xf32>, vector<128x32xf32>, vector<8x32xf32> -> vector<8x32xf32>
    %cst_12 = arith.constant 1.000000e+00 : f32
    %36 = vector.broadcast %cst_12 : f32 to vector<8x32xf32>
    %37 = arith.subf %36, %35 : vector<8x32xf32>
    %38 = arith.mulf %37, %34 : vector<8x32xf32>
    %39 = arith.mulf %35, %19 : vector<8x32xf32>
    %40 = arith.addf %38, %39 : vector<8x32xf32>
    %41 = vector.extract_strided_slice %7 {offsets = [8, 0], sizes = [8, 128], strides = [1, 1]} : vector<64x128xf32> to vector<8x128xf32>
    %cst_13 = arith.constant dense<0.000000e+00> : vector<8x128xf32>
    %42 = tpu.matmul %40, %8, %cst_13 {dimension_numbers = #tpu.dot_dimension_numbers<[1], [0], [0], [1], [0, 0, 1, 1], [], []>} : vector<8x32xf32>, vector<32x128xf32>, vector<8x128xf32> -> vector<8x128xf32>
    %43 = arith.addf %41, %42 : vector<8x128xf32>
    %44 = arith.negf %43 : vector<8x128xf32>
    %45 = math.exp %44 : vector<8x128xf32>
    %cst_14 = arith.constant 1.000000e+00 : f32
    %46 = vector.broadcast %cst_14 : f32 to vector<8x128xf32>
    %47 = arith.addf %46, %45 : vector<8x128xf32>
    %48 = arith.divf %46, %47 : vector<8x128xf32>
    %c64_i32_15 = arith.constant 64 : i32
    %49 = tpu.dynamic_rotate %48 by %c64_i32_15 dim 1 : vector<8x128xf32>, i32 -> vector<8x128xf32>
    %50 = arith.addf %42, %11 : vector<8x128xf32>
    %51 = arith.mulf %49, %50 : vector<8x128xf32>
    %52 = arith.addf %41, %51 : vector<8x128xf32>
    %53 = math.tanh %52 : vector<8x128xf32>
    %c64_i32_16 = arith.constant 64 : i32
    %54 = tpu.dynamic_rotate %53 by %c64_i32_16 dim 1 : vector<8x128xf32>, i32 -> vector<8x128xf32>
    %55 = vector.extract_strided_slice %54 {offsets = [0, 0], sizes = [8, 32], strides = [1, 1]} : vector<8x128xf32> to vector<8x32xf32>
    %cst_17 = arith.constant dense<0.000000e+00> : vector<8x32xf32>
    %56 = tpu.matmul %48, %18, %cst_17 {dimension_numbers = #tpu.dot_dimension_numbers<[1], [0], [0], [1], [0, 0, 1, 1], [], []>} : vector<8x128xf32>, vector<128x32xf32>, vector<8x32xf32> -> vector<8x32xf32>
    %cst_18 = arith.constant 1.000000e+00 : f32
    %57 = vector.broadcast %cst_18 : f32 to vector<8x32xf32>
    %58 = arith.subf %57, %56 : vector<8x32xf32>
    %59 = arith.mulf %58, %55 : vector<8x32xf32>
    %60 = arith.mulf %56, %40 : vector<8x32xf32>
    %61 = arith.addf %59, %60 : vector<8x32xf32>
    %62 = vector.extract_strided_slice %7 {offsets = [16, 0], sizes = [8, 128], strides = [1, 1]} : vector<64x128xf32> to vector<8x128xf32>
    %cst_19 = arith.constant dense<0.000000e+00> : vector<8x128xf32>
    %63 = tpu.matmul %61, %8, %cst_19 {dimension_numbers = #tpu.dot_dimension_numbers<[1], [0], [0], [1], [0, 0, 1, 1], [], []>} : vector<8x32xf32>, vector<32x128xf32>, vector<8x128xf32> -> vector<8x128xf32>
    %64 = arith.addf %62, %63 : vector<8x128xf32>
    %65 = arith.negf %64 : vector<8x128xf32>
    %66 = math.exp %65 : vector<8x128xf32>
    %cst_20 = arith.constant 1.000000e+00 : f32
    %67 = vector.broadcast %cst_20 : f32 to vector<8x128xf32>
    %68 = arith.addf %67, %66 : vector<8x128xf32>
    %69 = arith.divf %67, %68 : vector<8x128xf32>
    %c64_i32_21 = arith.constant 64 : i32
    %70 = tpu.dynamic_rotate %69 by %c64_i32_21 dim 1 : vector<8x128xf32>, i32 -> vector<8x128xf32>
    %71 = arith.addf %63, %11 : vector<8x128xf32>
    %72 = arith.mulf %70, %71 : vector<8x128xf32>
    %73 = arith.addf %62, %72 : vector<8x128xf32>
    %74 = math.tanh %73 : vector<8x128xf32>
    %c64_i32_22 = arith.constant 64 : i32
    %75 = tpu.dynamic_rotate %74 by %c64_i32_22 dim 1 : vector<8x128xf32>, i32 -> vector<8x128xf32>
    %76 = vector.extract_strided_slice %75 {offsets = [0, 0], sizes = [8, 32], strides = [1, 1]} : vector<8x128xf32> to vector<8x32xf32>
    %cst_23 = arith.constant dense<0.000000e+00> : vector<8x32xf32>
    %77 = tpu.matmul %69, %18, %cst_23 {dimension_numbers = #tpu.dot_dimension_numbers<[1], [0], [0], [1], [0, 0, 1, 1], [], []>} : vector<8x128xf32>, vector<128x32xf32>, vector<8x32xf32> -> vector<8x32xf32>
    %cst_24 = arith.constant 1.000000e+00 : f32
    %78 = vector.broadcast %cst_24 : f32 to vector<8x32xf32>
    %79 = arith.subf %78, %77 : vector<8x32xf32>
    %80 = arith.mulf %79, %76 : vector<8x32xf32>
    %81 = arith.mulf %77, %61 : vector<8x32xf32>
    %82 = arith.addf %80, %81 : vector<8x32xf32>
    %83 = vector.extract_strided_slice %7 {offsets = [24, 0], sizes = [8, 128], strides = [1, 1]} : vector<64x128xf32> to vector<8x128xf32>
    %cst_25 = arith.constant dense<0.000000e+00> : vector<8x128xf32>
    %84 = tpu.matmul %82, %8, %cst_25 {dimension_numbers = #tpu.dot_dimension_numbers<[1], [0], [0], [1], [0, 0, 1, 1], [], []>} : vector<8x32xf32>, vector<32x128xf32>, vector<8x128xf32> -> vector<8x128xf32>
    %85 = arith.addf %83, %84 : vector<8x128xf32>
    %86 = arith.negf %85 : vector<8x128xf32>
    %87 = math.exp %86 : vector<8x128xf32>
    %cst_26 = arith.constant 1.000000e+00 : f32
    %88 = vector.broadcast %cst_26 : f32 to vector<8x128xf32>
    %89 = arith.addf %88, %87 : vector<8x128xf32>
    %90 = arith.divf %88, %89 : vector<8x128xf32>
    %c64_i32_27 = arith.constant 64 : i32
    %91 = tpu.dynamic_rotate %90 by %c64_i32_27 dim 1 : vector<8x128xf32>, i32 -> vector<8x128xf32>
    %92 = arith.addf %84, %11 : vector<8x128xf32>
    %93 = arith.mulf %91, %92 : vector<8x128xf32>
    %94 = arith.addf %83, %93 : vector<8x128xf32>
    %95 = math.tanh %94 : vector<8x128xf32>
    %c64_i32_28 = arith.constant 64 : i32
    %96 = tpu.dynamic_rotate %95 by %c64_i32_28 dim 1 : vector<8x128xf32>, i32 -> vector<8x128xf32>
    %97 = vector.extract_strided_slice %96 {offsets = [0, 0], sizes = [8, 32], strides = [1, 1]} : vector<8x128xf32> to vector<8x32xf32>
    %cst_29 = arith.constant dense<0.000000e+00> : vector<8x32xf32>
    %98 = tpu.matmul %90, %18, %cst_29 {dimension_numbers = #tpu.dot_dimension_numbers<[1], [0], [0], [1], [0, 0, 1, 1], [], []>} : vector<8x128xf32>, vector<128x32xf32>, vector<8x32xf32> -> vector<8x32xf32>
    %cst_30 = arith.constant 1.000000e+00 : f32
    %99 = vector.broadcast %cst_30 : f32 to vector<8x32xf32>
    %100 = arith.subf %99, %98 : vector<8x32xf32>
    %101 = arith.mulf %100, %97 : vector<8x32xf32>
    %102 = arith.mulf %98, %82 : vector<8x32xf32>
    %103 = arith.addf %101, %102 : vector<8x32xf32>
    %104 = vector.extract_strided_slice %7 {offsets = [32, 0], sizes = [8, 128], strides = [1, 1]} : vector<64x128xf32> to vector<8x128xf32>
    %cst_31 = arith.constant dense<0.000000e+00> : vector<8x128xf32>
    %105 = tpu.matmul %103, %8, %cst_31 {dimension_numbers = #tpu.dot_dimension_numbers<[1], [0], [0], [1], [0, 0, 1, 1], [], []>} : vector<8x32xf32>, vector<32x128xf32>, vector<8x128xf32> -> vector<8x128xf32>
    %106 = arith.addf %104, %105 : vector<8x128xf32>
    %107 = arith.negf %106 : vector<8x128xf32>
    %108 = math.exp %107 : vector<8x128xf32>
    %cst_32 = arith.constant 1.000000e+00 : f32
    %109 = vector.broadcast %cst_32 : f32 to vector<8x128xf32>
    %110 = arith.addf %109, %108 : vector<8x128xf32>
    %111 = arith.divf %109, %110 : vector<8x128xf32>
    %c64_i32_33 = arith.constant 64 : i32
    %112 = tpu.dynamic_rotate %111 by %c64_i32_33 dim 1 : vector<8x128xf32>, i32 -> vector<8x128xf32>
    %113 = arith.addf %105, %11 : vector<8x128xf32>
    %114 = arith.mulf %112, %113 : vector<8x128xf32>
    %115 = arith.addf %104, %114 : vector<8x128xf32>
    %116 = math.tanh %115 : vector<8x128xf32>
    %c64_i32_34 = arith.constant 64 : i32
    %117 = tpu.dynamic_rotate %116 by %c64_i32_34 dim 1 : vector<8x128xf32>, i32 -> vector<8x128xf32>
    %118 = vector.extract_strided_slice %117 {offsets = [0, 0], sizes = [8, 32], strides = [1, 1]} : vector<8x128xf32> to vector<8x32xf32>
    %cst_35 = arith.constant dense<0.000000e+00> : vector<8x32xf32>
    %119 = tpu.matmul %111, %18, %cst_35 {dimension_numbers = #tpu.dot_dimension_numbers<[1], [0], [0], [1], [0, 0, 1, 1], [], []>} : vector<8x128xf32>, vector<128x32xf32>, vector<8x32xf32> -> vector<8x32xf32>
    %cst_36 = arith.constant 1.000000e+00 : f32
    %120 = vector.broadcast %cst_36 : f32 to vector<8x32xf32>
    %121 = arith.subf %120, %119 : vector<8x32xf32>
    %122 = arith.mulf %121, %118 : vector<8x32xf32>
    %123 = arith.mulf %119, %103 : vector<8x32xf32>
    %124 = arith.addf %122, %123 : vector<8x32xf32>
    %125 = vector.extract_strided_slice %7 {offsets = [40, 0], sizes = [8, 128], strides = [1, 1]} : vector<64x128xf32> to vector<8x128xf32>
    %cst_37 = arith.constant dense<0.000000e+00> : vector<8x128xf32>
    %126 = tpu.matmul %124, %8, %cst_37 {dimension_numbers = #tpu.dot_dimension_numbers<[1], [0], [0], [1], [0, 0, 1, 1], [], []>} : vector<8x32xf32>, vector<32x128xf32>, vector<8x128xf32> -> vector<8x128xf32>
    %127 = arith.addf %125, %126 : vector<8x128xf32>
    %128 = arith.negf %127 : vector<8x128xf32>
    %129 = math.exp %128 : vector<8x128xf32>
    %cst_38 = arith.constant 1.000000e+00 : f32
    %130 = vector.broadcast %cst_38 : f32 to vector<8x128xf32>
    %131 = arith.addf %130, %129 : vector<8x128xf32>
    %132 = arith.divf %130, %131 : vector<8x128xf32>
    %c64_i32_39 = arith.constant 64 : i32
    %133 = tpu.dynamic_rotate %132 by %c64_i32_39 dim 1 : vector<8x128xf32>, i32 -> vector<8x128xf32>
    %134 = arith.addf %126, %11 : vector<8x128xf32>
    %135 = arith.mulf %133, %134 : vector<8x128xf32>
    %136 = arith.addf %125, %135 : vector<8x128xf32>
    %137 = math.tanh %136 : vector<8x128xf32>
    %c64_i32_40 = arith.constant 64 : i32
    %138 = tpu.dynamic_rotate %137 by %c64_i32_40 dim 1 : vector<8x128xf32>, i32 -> vector<8x128xf32>
    %139 = vector.extract_strided_slice %138 {offsets = [0, 0], sizes = [8, 32], strides = [1, 1]} : vector<8x128xf32> to vector<8x32xf32>
    %cst_41 = arith.constant dense<0.000000e+00> : vector<8x32xf32>
    %140 = tpu.matmul %132, %18, %cst_41 {dimension_numbers = #tpu.dot_dimension_numbers<[1], [0], [0], [1], [0, 0, 1, 1], [], []>} : vector<8x128xf32>, vector<128x32xf32>, vector<8x32xf32> -> vector<8x32xf32>
    %cst_42 = arith.constant 1.000000e+00 : f32
    %141 = vector.broadcast %cst_42 : f32 to vector<8x32xf32>
    %142 = arith.subf %141, %140 : vector<8x32xf32>
    %143 = arith.mulf %142, %139 : vector<8x32xf32>
    %144 = arith.mulf %140, %124 : vector<8x32xf32>
    %145 = arith.addf %143, %144 : vector<8x32xf32>
    %146 = vector.extract_strided_slice %7 {offsets = [48, 0], sizes = [8, 128], strides = [1, 1]} : vector<64x128xf32> to vector<8x128xf32>
    %cst_43 = arith.constant dense<0.000000e+00> : vector<8x128xf32>
    %147 = tpu.matmul %145, %8, %cst_43 {dimension_numbers = #tpu.dot_dimension_numbers<[1], [0], [0], [1], [0, 0, 1, 1], [], []>} : vector<8x32xf32>, vector<32x128xf32>, vector<8x128xf32> -> vector<8x128xf32>
    %148 = arith.addf %146, %147 : vector<8x128xf32>
    %149 = arith.negf %148 : vector<8x128xf32>
    %150 = math.exp %149 : vector<8x128xf32>
    %cst_44 = arith.constant 1.000000e+00 : f32
    %151 = vector.broadcast %cst_44 : f32 to vector<8x128xf32>
    %152 = arith.addf %151, %150 : vector<8x128xf32>
    %153 = arith.divf %151, %152 : vector<8x128xf32>
    %c64_i32_45 = arith.constant 64 : i32
    %154 = tpu.dynamic_rotate %153 by %c64_i32_45 dim 1 : vector<8x128xf32>, i32 -> vector<8x128xf32>
    %155 = arith.addf %147, %11 : vector<8x128xf32>
    %156 = arith.mulf %154, %155 : vector<8x128xf32>
    %157 = arith.addf %146, %156 : vector<8x128xf32>
    %158 = math.tanh %157 : vector<8x128xf32>
    %c64_i32_46 = arith.constant 64 : i32
    %159 = tpu.dynamic_rotate %158 by %c64_i32_46 dim 1 : vector<8x128xf32>, i32 -> vector<8x128xf32>
    %160 = vector.extract_strided_slice %159 {offsets = [0, 0], sizes = [8, 32], strides = [1, 1]} : vector<8x128xf32> to vector<8x32xf32>
    %cst_47 = arith.constant dense<0.000000e+00> : vector<8x32xf32>
    %161 = tpu.matmul %153, %18, %cst_47 {dimension_numbers = #tpu.dot_dimension_numbers<[1], [0], [0], [1], [0, 0, 1, 1], [], []>} : vector<8x128xf32>, vector<128x32xf32>, vector<8x32xf32> -> vector<8x32xf32>
    %cst_48 = arith.constant 1.000000e+00 : f32
    %162 = vector.broadcast %cst_48 : f32 to vector<8x32xf32>
    %163 = arith.subf %162, %161 : vector<8x32xf32>
    %164 = arith.mulf %163, %160 : vector<8x32xf32>
    %165 = arith.mulf %161, %145 : vector<8x32xf32>
    %166 = arith.addf %164, %165 : vector<8x32xf32>
    %167 = vector.extract_strided_slice %7 {offsets = [56, 0], sizes = [8, 128], strides = [1, 1]} : vector<64x128xf32> to vector<8x128xf32>
    %cst_49 = arith.constant dense<0.000000e+00> : vector<8x128xf32>
    %168 = tpu.matmul %166, %8, %cst_49 {dimension_numbers = #tpu.dot_dimension_numbers<[1], [0], [0], [1], [0, 0, 1, 1], [], []>} : vector<8x32xf32>, vector<32x128xf32>, vector<8x128xf32> -> vector<8x128xf32>
    %169 = arith.addf %167, %168 : vector<8x128xf32>
    %170 = arith.negf %169 : vector<8x128xf32>
    %171 = math.exp %170 : vector<8x128xf32>
    %cst_50 = arith.constant 1.000000e+00 : f32
    %172 = vector.broadcast %cst_50 : f32 to vector<8x128xf32>
    %173 = arith.addf %172, %171 : vector<8x128xf32>
    %174 = arith.divf %172, %173 : vector<8x128xf32>
    %c64_i32_51 = arith.constant 64 : i32
    %175 = tpu.dynamic_rotate %174 by %c64_i32_51 dim 1 : vector<8x128xf32>, i32 -> vector<8x128xf32>
    %176 = arith.addf %168, %11 : vector<8x128xf32>
    %177 = arith.mulf %175, %176 : vector<8x128xf32>
    %178 = arith.addf %167, %177 : vector<8x128xf32>
    %179 = math.tanh %178 : vector<8x128xf32>
    %c64_i32_52 = arith.constant 64 : i32
    %180 = tpu.dynamic_rotate %179 by %c64_i32_52 dim 1 : vector<8x128xf32>, i32 -> vector<8x128xf32>
    %181 = vector.extract_strided_slice %180 {offsets = [0, 0], sizes = [8, 32], strides = [1, 1]} : vector<8x128xf32> to vector<8x32xf32>
    %cst_53 = arith.constant dense<0.000000e+00> : vector<8x32xf32>
    %182 = tpu.matmul %174, %18, %cst_53 {dimension_numbers = #tpu.dot_dimension_numbers<[1], [0], [0], [1], [0, 0, 1, 1], [], []>} : vector<8x128xf32>, vector<128x32xf32>, vector<8x32xf32> -> vector<8x32xf32>
    %cst_54 = arith.constant 1.000000e+00 : f32
    %183 = vector.broadcast %cst_54 : f32 to vector<8x32xf32>
    %184 = arith.subf %183, %182 : vector<8x32xf32>
    %185 = arith.mulf %184, %181 : vector<8x32xf32>
    %186 = arith.mulf %182, %166 : vector<8x32xf32>
    %187 = arith.addf %185, %186 : vector<8x32xf32>
    %c0_55 = arith.constant 0 : index
    %c0_56 = arith.constant 0 : index
    %c0_57 = arith.constant 0 : index
    %188 = vector.load %arg4[%c0_55, %c0_56, %c0_57] : memref<1x8x32xf32, #tpu.memory_space<vmem>>, vector<1x8x32xf32>
    %189 = vector.shape_cast %188 : vector<1x8x32xf32> to vector<8x32xf32>
    %190 = vector.shape_cast %187 : vector<8x32xf32> to vector<1x8x32xf32>
    tpu.vector_store %arg4[%c0_55, %c0_56, %c0_57], %190 {strides = array<i32>} : memref<1x8x32xf32, #tpu.memory_space<vmem>>, vector<1x8x32xf32>,
    return
  }
}

</mosaic_0001>

<llo_original>
// kernel: tpu_custom_call.1
$region0: #{tpu_custom_call.1}
  #allocation0 [shape = 'u32[]', space=smem, size = 0x4, offset = 0x4, fixed_abs, tag = 'smem constant byte address 0x4 - core index']
  #allocation1 [shape = 'u32[144,128]{1,0:T(1,128)}', space=vmem, size = 0x12000, scoped, tag = 'internal scratch']
  %s0 = inlined_call_operand.vmem [shape: s32[64,1], index: 0, kind: input, shape index: {}]
  %s1 = inlined_call_operand.vmem [shape: f32[16,128], index: 1, kind: input, shape index: {}]
  %s2 = inlined_call_operand.vmem [shape: f32[32,128], index: 2, kind: input, shape index: {}]
  %s3 = inlined_call_operand.vmem [shape: f32[1,128], index: 3, kind: input, shape index: {}]
  %s4 = inlined_call_operand.hbm [shape: f32[1,8,32], index: 4, kind: output, shape index: {}]
  %s5 = sld [smem:[#allocation0]]
  $region26: #{tpu_custom_call.1} parent=0
    _
  %s7 = ssub.s32 1, %s5
  %s8 = scalar_select 0, %s7, %s5
  $region1: #{tpu_custom_call.1} parent=0
    #allocation2 [shape = 'u8[4096]{0}', space=vmem, size = 0x1000, scoped, tag = 'output window, operand 0, single buffered']
    #allocation3 [shape = 's32[1]{0}', space=sflag, size = 0x4, scoped, tag = 'scoped memory for tpu_custom_call.1']
    %9 = vsyncpa [#allocation3], 0
    // Predicated region
    $region2: #{tpu_custom_call.1} parent=1 // pred_check
      _
    $region3: #{tpu_custom_call.1} parent=1 // pred_check_branch
      %11 = sbr.rel (0) target = $region5
    $region4: #{tpu_custom_call.1} parent=1 // pred_region
      _
    $region5: #{tpu_custom_call.1} parent=1 // pred_fallthru
      _
    // Predicated region
    $region6: #{tpu_custom_call.1} parent=1 // pred_check
      _
    $region7: #{tpu_custom_call.1} parent=1 // pred_check_branch
      %13 = sbr.rel (0) target = $region9
    $region8: #{tpu_custom_call.1} parent=1 // pred_region
      _
    $region9: #{tpu_custom_call.1} parent=1 // pred_fallthru
      _
    // Predicated region
    $region10: #{tpu_custom_call.1} parent=1 // pred_check
      _
    $region11: #{tpu_custom_call.1} parent=1 // pred_check_branch
      %15 = sbr.rel (0) target = $region13
    $region12: #{tpu_custom_call.1} parent=1 // pred_region
      _
    $region13: #{tpu_custom_call.1} parent=1 // pred_fallthru
      _
    // Predicated region
    $region14: #{tpu_custom_call.1} parent=1 // pred_check
      _
    $region15: #{tpu_custom_call.1} parent=1 // pred_check_branch
      %17 = sbr.rel (0) target = $region17
    $region16: #{tpu_custom_call.1} parent=1 // pred_region
      _
    $region17: #{tpu_custom_call.1} parent=1 // pred_fallthru
      _
    %v18 = vld [vmem:[%s0] sm:$0xff]
    %v19 = vld [vmem:[%s0 + $0x8] sm:$0xff]
    %v20 = vld [vmem:[%s0 + $0x10] sm:$0xff]
    %v21 = vld [vmem:[%s0 + $0x18] sm:$0xff]
    %v22 = vld [vmem:[%s0 + $0x20] sm:$0xff]
    %v23 = vld [vmem:[%s0 + $0x28] sm:$0xff]
    %v24 = vld [vmem:[%s0 + $0x30] sm:$0xff]
    %v25 = vld [vmem:[%s0 + $0x38] sm:$0xff]
    %v26 = vlaneseq
    %v27 = vand.u32 %v26, 127
    %28 = vset.pattern.permute.xlu0 0
    %29 = vperm.xlu0 %28, %v18
    %v30 = vpop.permute.xlu0 %29
    %31 = vset.pattern.permute.xlu0 0
    %32 = vperm.xlu0 %31, %v19
    %v33 = vpop.permute.xlu0 %32
    %34 = vset.pattern.permute.xlu0 0
    %35 = vperm.xlu0 %34, %v20
    %v36 = vpop.permute.xlu0 %35
    %37 = vset.pattern.permute.xlu0 0
    %38 = vperm.xlu0 %37, %v21
    %v39 = vpop.permute.xlu0 %38
    %40 = vset.pattern.permute.xlu0 0
    %41 = vperm.xlu0 %40, %v22
    %v42 = vpop.permute.xlu0 %41
    %43 = vset.pattern.permute.xlu0 0
    %44 = vperm.xlu0 %43, %v23
    %v45 = vpop.permute.xlu0 %44
    %46 = vset.pattern.permute.xlu0 0
    %47 = vperm.xlu0 %46, %v24
    %v48 = vpop.permute.xlu0 %47
    %49 = vset.pattern.permute.xlu0 0
    %50 = vperm.xlu0 %49, %v25
    %v51 = vpop.permute.xlu0 %50
    %vm52 = vcmp.eq.s32.totalorder %v30, %v27
    %vm53 = vcmp.eq.s32.totalorder %v33, %v27
    %vm54 = vcmp.eq.s32.totalorder %v36, %v27
    %vm55 = vcmp.eq.s32.totalorder %v39, %v27
    %vm56 = vcmp.eq.s32.totalorder %v42, %v27
    %vm57 = vcmp.eq.s32.totalorder %v45, %v27
    %vm58 = vcmp.eq.s32.totalorder %v48, %v27
    %vm59 = vcmp.eq.s32.totalorder %v51, %v27
    %v60 = vsel %vm52, 1, 0
    %v61 = vsel %vm53, 1, 0
    %v62 = vsel %vm54, 1, 0
    %v63 = vsel %vm55, 1, 0
    %v64 = vsel %vm56, 1, 0
    %v65 = vsel %vm57, 1, 0
    %v66 = vsel %vm58, 1, 0
    %v67 = vsel %vm59, 1, 0
    %v68 = vcvt.s32.f32 %v60
    %v69 = vcvt.s32.f32 %v61
    %v70 = vcvt.s32.f32 %v62
    %v71 = vcvt.s32.f32 %v63
    %v72 = vcvt.s32.f32 %v64
    %v73 = vcvt.s32.f32 %v65
    %v74 = vcvt.s32.f32 %v66
    %v75 = vcvt.s32.f32 %v67
    %v76 = vld [vmem:[%s1] sm:$0xff]
    %v77 = vld [vmem:[%s1 + $0x8] sm:$0xff]
    %vm78 = vcmask 130048
    %v80 = vsel %vm78, %v68, 0
    %v83 = vsel %vm78, %v69, 0
    %v86 = vsel %vm78, %v70, 0
    %v89 = vsel %vm78, %v71, 0
    %v92 = vsel %vm78, %v72, 0
    %v95 = vsel %vm78, %v73, 0
    %v98 = vsel %vm78, %v74, 0
    %v101 = vsel %vm78, %v75, 0
    %103 = vmatprep.subr.mxu0 0.0
    %104 = vmatpush1.msra.mxu0 %v76
    %105 = vmatprep.subr.mxu0 0.0
    %106 = vmatpush1.msra.mxu0 %v77
    %107 = vmatprep.subr.mxu0 0.0
    %108 = vmatpush1.msra.mxu0 0.0
    %109 = vmatprep.subr.mxu0 0.0
    %110 = vmatpush1.msra.mxu0 0.0
    %111 = vmatprep.subr.mxu0 0.0
    %112 = vmatpush1.msra.mxu0 0.0
    %113 = vmatprep.subr.mxu0 0.0
    %114 = vmatpush1.msra.mxu0 0.0
    %115 = vmatprep.subr.mxu0 0.0
    %116 = vmatpush1.msra.mxu0 0.0
    %117 = vmatprep.subr.mxu0 0.0
    %118 = vmatpush1.msra.mxu0 0.0
    %119 = vmatprep.subr.mxu0 0.0
    %120 = vmatpush1.msra.mxu0 0.0
    %121 = vmatprep.subr.mxu0 0.0
    %122 = vmatpush1.msra.mxu0 0.0
    %123 = vmatprep.subr.mxu0 0.0
    %124 = vmatpush1.msra.mxu0 0.0
    %125 = vmatprep.subr.mxu0 0.0
    %126 = vmatpush1.msra.mxu0 0.0
    %127 = vmatprep.subr.mxu0 0.0
    %128 = vmatpush1.msra.mxu0 0.0
    %129 = vmatprep.subr.mxu0 0.0
    %130 = vmatpush1.msra.mxu0 0.0
    %131 = vmatprep.subr.mxu0 0.0
    %132 = vmatpush1.msra.mxu0 0.0
    %133 = vmatprep.subr.mxu0 0.0
    %134 = vmatpush1.msra.mxu0 0.0
    %135 = vmatprep.subr.mxu0 0.0
    %136 = vmatpush1.msra.mxu0 0.0
    %137 = vmatprep.subr.mxu0 0.0
    %138 = vmatpush1.msra.mxu0 0.0
    %139 = vmatprep.subr.mxu0 0.0
    %140 = vmatpush1.msra.mxu0 0.0
    %141 = vmatprep.subr.mxu0 0.0
    %142 = vmatpush1.msra.mxu0 0.0
    %143 = vmatprep.subr.mxu0 0.0
    %144 = vmatpush1.msra.mxu0 0.0
    %145 = vmatprep.subr.mxu0 0.0
    %146 = vmatpush1.msra.mxu0 0.0
    %147 = vmatprep.subr.mxu0 0.0
    %148 = vmatpush1.msra.mxu0 0.0
    %149 = vmatprep.subr.mxu0 0.0
    %150 = vmatpush1.msra.mxu0 0.0
    %151 = vmatprep.subr.mxu0 0.0
    %152 = vmatpush1.msra.mxu0 0.0
    %153 = vmatprep.subr.mxu0 0.0
    %154 = vmatpush1.msra.mxu0 0.0
    %155 = vmatprep.subr.mxu0 0.0
    %156 = vmatpush1.msra.mxu0 0.0
    %157 = vmatprep.subr.mxu0 0.0
    %158 = vmatpush1.msra.mxu0 0.0
    %159 = vmatprep.subr.mxu0 0.0
    %160 = vmatpush1.msra.mxu0 0.0
    %161 = vmatprep.subr.mxu0 0.0
    %162 = vmatpush1.msra.mxu0 0.0
    %163 = vmatprep.subr.mxu0 0.0
    %164 = vmatpush1.msra.mxu0 0.0
    %165 = vmatprep.subr.mxu0 0.0
    %166 = vmatpush1.msra.mxu0 0.0
    %167 = vmatprep.mubr.f32.mxu0 0.0
    %168 = vmatmul.mubr.f32.gmra.mrb[0].mxu0 %v80
    %v169 = vpop.f32.mrb[0].mxu0
    %v170 = vadd.f32 0.0, %v169
    %v171 = vpop.f32.mrb[0].mxu0
    %172 = vmatprep.mubr.f32.mxu0 0.0
    %173 = vmatmul.mubr.f32.gmra.mrb[0].mxu0 %v83
    %v174 = vpop.f32.mrb[0].mxu0
    %v175 = vadd.f32 0.0, %v174
    %v176 = vpop.f32.mrb[0].mxu0
    %177 = vmatprep.mubr.f32.mxu0 0.0
    %178 = vmatmul.mubr.f32.gmra.mrb[0].mxu0 %v86
    %v179 = vpop.f32.mrb[0].mxu0
    %v180 = vadd.f32 0.0, %v179
    %v181 = vpop.f32.mrb[0].mxu0
    %182 = vmatprep.mubr.f32.mxu0 0.0
    %183 = vmatmul.mubr.f32.gmra.mrb[0].mxu0 %v89
    %v184 = vpop.f32.mrb[0].mxu0
    %v185 = vadd.f32 0.0, %v184
    %v186 = vpop.f32.mrb[0].mxu0
    %187 = vmatprep.mubr.f32.mxu0 0.0
    %188 = vmatmul.mubr.f32.gmra.mrb[0].mxu0 %v92
    %v189 = vpop.f32.mrb[0].mxu0
    %v190 = vadd.f32 0.0, %v189
    %v191 = vpop.f32.mrb[0].mxu0
    %192 = vmatprep.mubr.f32.mxu0 0.0
    %193 = vmatmul.mubr.f32.gmra.mrb[0].mxu0 %v95
    %v194 = vpop.f32.mrb[0].mxu0
    %v195 = vadd.f32 0.0, %v194
    %v196 = vpop.f32.mrb[0].mxu0
    %197 = vmatprep.mubr.f32.mxu0 0.0
    %198 = vmatmul.mubr.f32.gmra.mrb[0].mxu0 %v98
    %v199 = vpop.f32.mrb[0].mxu0
    %v200 = vadd.f32 0.0, %v199
    %v201 = vpop.f32.mrb[0].mxu0
    %202 = vmatprep.mubr.f32.mxu0 0.0
    %203 = vmatmul.mubr.f32.gmra.mrb[0].mxu0 %v101
    %v204 = vpop.f32.mrb[0].mxu0
    %v205 = vadd.f32 0.0, %v204
    %v206 = vpop.f32.mrb[0].mxu0
    %207 = vdwg.mxu0
    %v208 = vld [vmem:[%s2] sm:$0xff]
    %v209 = vld [vmem:[%s2 + $0x8] sm:$0xff]
    %v210 = vld [vmem:[%s2 + $0x10] sm:$0xff]
    %v211 = vld [vmem:[%s2 + $0x18] sm:$0xff]
    %v212 = vld [vmem:[%s3] sm:$0x1]
    %v214 = vlaneseq
    %v215 = vshrl.u32 %v214, 7
    %v216 = vsub.s32 0, %v215
    %v217 = vrot.slane %v212, %v216
    %v219 = vlaneseq
    %v220 = vshrl.u32 %v219, 7
    %v221 = vadd.s32 %v220, 8
    %v222 = vadd.s32 %v220, 16
    %v223 = vadd.s32 %v220, 24
    %v224 = vadd.s32 %v220, 32
    %v225 = vadd.s32 %v220, 40
    %v226 = vadd.s32 %v220, 48
    %v227 = vadd.s32 %v220, 56
    %v228 = vadd.s32 %v220, 64
    %v229 = vadd.s32 %v220, 72
    %v230 = vadd.s32 %v220, 80
    %v231 = vadd.s32 %v220, 88
    %v232 = vadd.s32 %v220, 96
    %v233 = vadd.s32 %v220, 104
    %v234 = vadd.s32 %v220, 112
    %v235 = vadd.s32 %v220, 120
    %v236 = vadd.s32 %v27, 32
    %vm237 = vcmp.eq.s32.totalorder %v220, %v236
    %vm238 = vcmp.eq.s32.totalorder %v221, %v236
    %vm239 = vcmp.eq.s32.totalorder %v222, %v236
    %vm240 = vcmp.eq.s32.totalorder %v223, %v236
    %vm241 = vcmp.eq.s32.totalorder %v224, %v236
    %vm242 = vcmp.eq.s32.totalorder %v225, %v236
    %vm243 = vcmp.eq.s32.totalorder %v226, %v236
    %vm244 = vcmp.eq.s32.totalorder %v227, %v236
    %vm245 = vcmp.eq.s32.totalorder %v228, %v236
    %vm246 = vcmp.eq.s32.totalorder %v229, %v236
    %vm247 = vcmp.eq.s32.totalorder %v230, %v236
    %vm248 = vcmp.eq.s32.totalorder %v231, %v236
    %vm249 = vcmp.eq.s32.totalorder %v232, %v236
    %vm250 = vcmp.eq.s32.totalorder %v233, %v236
    %vm251 = vcmp.eq.s32.totalorder %v234, %v236
    %vm252 = vcmp.eq.s32.totalorder %v235, %v236
    %v253 = vsel %vm237, 1, 0
    %v254 = vsel %vm238, 1, 0
    %v255 = vsel %vm239, 1, 0
    %v256 = vsel %vm240, 1, 0
    %v257 = vsel %vm241, 1, 0
    %v258 = vsel %vm242, 1, 0
    %v259 = vsel %vm243, 1, 0
    %v260 = vsel %vm244, 1, 0
    %v261 = vsel %vm245, 1, 0
    %v262 = vsel %vm246, 1, 0
    %v263 = vsel %vm247, 1, 0
    %v264 = vsel %vm248, 1, 0
    %v265 = vsel %vm249, 1, 0
    %v266 = vsel %vm250, 1, 0
    %v267 = vsel %vm251, 1, 0
    %v268 = vsel %vm252, 1, 0
    %v269 = vcvt.s32.f32 %v253
    %v270 = vcvt.s32.f32 %v254
    %v271 = vcvt.s32.f32 %v255
    %v272 = vcvt.s32.f32 %v256
    %v273 = vcvt.s32.f32 %v257
    %v274 = vcvt.s32.f32 %v258
    %v275 = vcvt.s32.f32 %v259
    %v276 = vcvt.s32.f32 %v260
    %v277 = vcvt.s32.f32 %v261
    %v278 = vcvt.s32.f32 %v262
    %v279 = vcvt.s32.f32 %v263
    %v280 = vcvt.s32.f32 %v264
    %v281 = vcvt.s32.f32 %v265
    %v282 = vcvt.s32.f32 %v266
    %v283 = vcvt.s32.f32 %v267
    %v284 = vcvt.s32.f32 %v268
    %vm285 = vcmask 261120
    %v287 = vsel %vm285, 0.0, 0
    %289 = vmatprep.subr.mxu0 0.0
    %290 = vmatpush1.msra.mxu0 %v208
    %291 = vmatprep.subr.mxu0 0.0
    %292 = vmatpush1.msra.mxu0 %v209
    %293 = vmatprep.subr.mxu0 0.0
    %294 = vmatpush1.msra.mxu0 %v210
    %295 = vmatprep.subr.mxu0 0.0
    %296 = vmatpush1.msra.mxu0 %v211
    %297 = vmatprep.subr.mxu0 0.0
    %298 = vmatpush1.msra.mxu0 0.0
    %299 = vmatprep.subr.mxu0 0.0
    %300 = vmatpush1.msra.mxu0 0.0
    %301 = vmatprep.subr.mxu0 0.0
    %302 = vmatpush1.msra.mxu0 0.0
    %303 = vmatprep.subr.mxu0 0.0
    %304 = vmatpush1.msra.mxu0 0.0
    %305 = vmatprep.subr.mxu0 0.0
    %306 = vmatpush1.msra.mxu0 0.0
    %307 = vmatprep.subr.mxu0 0.0
    %308 = vmatpush1.msra.mxu0 0.0
    %309 = vmatprep.subr.mxu0 0.0
    %310 = vmatpush1.msra.mxu0 0.0
    %311 = vmatprep.subr.mxu0 0.0
    %312 = vmatpush1.msra.mxu0 0.0
    %313 = vmatprep.subr.mxu0 0.0
    %314 = vmatpush1.msra.mxu0 0.0
    %315 = vmatprep.subr.mxu0 0.0
    %316 = vmatpush1.msra.mxu0 0.0
    %317 = vmatprep.subr.mxu0 0.0
    %318 = vmatpush1.msra.mxu0 0.0
    %319 = vmatprep.subr.mxu0 0.0
    %320 = vmatpush1.msra.mxu0 0.0
    %321 = vmatprep.subr.mxu0 0.0
    %322 = vmatpush1.msra.mxu0 0.0
    %323 = vmatprep.subr.mxu0 0.0
    %324 = vmatpush1.msra.mxu0 0.0
    %325 = vmatprep.subr.mxu0 0.0
    %326 = vmatpush1.msra.mxu0 0.0
    %327 = vmatprep.subr.mxu0 0.0
    %328 = vmatpush1.msra.mxu0 0.0
    %329 = vmatprep.subr.mxu0 0.0
    %330 = vmatpush1.msra.mxu0 0.0
    %331 = vmatprep.subr.mxu0 0.0
    %332 = vmatpush1.msra.mxu0 0.0
    %333 = vmatprep.subr.mxu0 0.0
    %334 = vmatpush1.msra.mxu0 0.0
    %335 = vmatprep.subr.mxu0 0.0
    %336 = vmatpush1.msra.mxu0 0.0
    %337 = vmatprep.subr.mxu0 0.0
    %338 = vmatpush1.msra.mxu0 0.0
    %339 = vmatprep.subr.mxu0 0.0
    %340 = vmatpush1.msra.mxu0 0.0
    %341 = vmatprep.subr.mxu0 0.0
    %342 = vmatpush1.msra.mxu0 0.0
    %343 = vmatprep.subr.mxu0 0.0
    %344 = vmatpush1.msra.mxu0 0.0
    %345 = vmatprep.subr.mxu0 0.0
    %346 = vmatpush1.msra.mxu0 0.0
    %347 = vmatprep.subr.mxu0 0.0
    %348 = vmatpush1.msra.mxu0 0.0
    %349 = vmatprep.subr.mxu0 0.0
    %350 = vmatpush1.msra.mxu0 0.0
    %351 = vmatprep.subr.mxu0 0.0
    %352 = vmatpush1.msra.mxu0 0.0
    %353 = vmatprep.mubr.f32.mxu0 0.0
    %354 = vmatmul.mubr.f32.gmra.mrb[0].mxu0 %v287
    %v355 = vpop.f32.mrb[0].mxu0
    %v356 = vadd.f32 0.0, %v355
    %v357 = vpop.f32.mrb[0].mxu0
    %358 = vdwg.mxu0
    %v359 = vadd.f32 %v170, %v356
    %v360 = vxor.u32 %v359, 2147483648
    %v361 = vmul.f32 %v360, 1.442695
    %v362 = vpow.pop %v361
    %v363 = vadd.f32 %v362, 1.0
    %v364 = vrcp.pop %v363
    %v365 = vmul.f32 1.0, %v364
    %366 = vrot.lane.b32.xlu0 %v365, 64
    %v367 = vpop.permute.xlu0 %366
    %v368 = vadd.f32 %v356, %v217
    %v369 = vmul.f32 %v367, %v368
    %v370 = vadd.f32 %v170, %v369
    %v371 = vtanh.pop %v370
    %372 = vrot.lane.b32.xlu0 %v371, 64
    %v373 = vpop.permute.xlu0 %372
    %374 = vmatprep.subr.mxu0 0.0
    %375 = vmatpush1.msra.mxu0 %v269
    %376 = vmatprep.subr.mxu0 0.0
    %377 = vmatpush1.msra.mxu0 %v270
    %378 = vmatprep.subr.mxu0 0.0
    %379 = vmatpush1.msra.mxu0 %v271
    %380 = vmatprep.subr.mxu0 0.0
    %381 = vmatpush1.msra.mxu0 %v272
    %382 = vmatprep.subr.mxu0 0.0
    %383 = vmatpush1.msra.mxu0 %v273
    %384 = vmatprep.subr.mxu0 0.0
    %385 = vmatpush1.msra.mxu0 %v274
    %386 = vmatprep.subr.mxu0 0.0
    %387 = vmatpush1.msra.mxu0 %v275
    %388 = vmatprep.subr.mxu0 0.0
    %389 = vmatpush1.msra.mxu0 %v276
    %390 = vmatprep.subr.mxu0 0.0
    %391 = vmatpush1.msra.mxu0 %v277
    %392 = vmatprep.subr.mxu0 0.0
    %393 = vmatpush1.msra.mxu0 %v278
    %394 = vmatprep.subr.mxu0 0.0
    %395 = vmatpush1.msra.mxu0 %v279
    %396 = vmatprep.subr.mxu0 0.0
    %397 = vmatpush1.msra.mxu0 %v280
    %398 = vmatprep.subr.mxu0 0.0
    %399 = vmatpush1.msra.mxu0 %v281
    %400 = vmatprep.subr.mxu0 0.0
    %401 = vmatpush1.msra.mxu0 %v282
    %402 = vmatprep.subr.mxu0 0.0
    %403 = vmatpush1.msra.mxu0 %v283
    %404 = vmatprep.subr.mxu0 0.0
    %405 = vmatpush1.msra.mxu0 %v284
    %406 = vmatprep.subr.mxu0 0.0
    %407 = vmatpush1.msra.mxu0 0.0
    %408 = vmatprep.subr.mxu0 0.0
    %409 = vmatpush1.msra.mxu0 0.0
    %410 = vmatprep.subr.mxu0 0.0
    %411 = vmatpush1.msra.mxu0 0.0
    %412 = vmatprep.subr.mxu0 0.0
    %413 = vmatpush1.msra.mxu0 0.0
    %414 = vmatprep.subr.mxu0 0.0
    %415 = vmatpush1.msra.mxu0 0.0
    %416 = vmatprep.subr.mxu0 0.0
    %417 = vmatpush1.msra.mxu0 0.0
    %418 = vmatprep.subr.mxu0 0.0
    %419 = vmatpush1.msra.mxu0 0.0
    %420 = vmatprep.subr.mxu0 0.0
    %421 = vmatpush1.msra.mxu0 0.0
    %422 = vmatprep.subr.mxu0 0.0
    %423 = vmatpush1.msra.mxu0 0.0
    %424 = vmatprep.subr.mxu0 0.0
    %425 = vmatpush1.msra.mxu0 0.0
    %426 = vmatprep.subr.mxu0 0.0
    %427 = vmatpush1.msra.mxu0 0.0
    %428 = vmatprep.subr.mxu0 0.0
    %429 = vmatpush1.msra.mxu0 0.0
    %430 = vmatprep.subr.mxu0 0.0
    %431 = vmatpush1.msra.mxu0 0.0
    %432 = vmatprep.subr.mxu0 0.0
    %433 = vmatpush1.msra.mxu0 0.0
    %434 = vmatprep.subr.mxu0 0.0
    %435 = vmatpush1.msra.mxu0 0.0
    %436 = vmatprep.subr.mxu0 0.0
    %437 = vmatpush1.msra.mxu0 0.0
    %438 = vmatprep.mubr.f32.mxu0 0.0
    %439 = vmatmul.mubr.f32.gmra.mrb[0].mxu0 %v365
    %v440 = vpop.f32.mrb[0].mxu0
    %v441 = vadd.f32 0.0, %v440
    %v442 = vpop.f32.mrb[0].mxu0
    %443 = vdwg.mxu0
    %v444 = vsub.f32 1.0, %v441
    %v445 = vmul.f32 %v444, %v373
    %v446 = vmul.f32 %v441, 0.0
    %v447 = vadd.f32 %v445, %v446
    %v449 = vsel %vm285, %v447, 0
    %451 = vmatprep.subr.mxu0 0.0
    %452 = vmatpush1.msra.mxu0 %v208
    %453 = vmatprep.subr.mxu0 0.0
    %454 = vmatpush1.msra.mxu0 %v209
    %455 = vmatprep.subr.mxu0 0.0
    %456 = vmatpush1.msra.mxu0 %v210
    %457 = vmatprep.subr.mxu0 0.0
    %458 = vmatpush1.msra.mxu0 %v211
    %459 = vmatprep.subr.mxu0 0.0
    %460 = vmatpush1.msra.mxu0 0.0
    %461 = vmatprep.subr.mxu0 0.0
    %462 = vmatpush1.msra.mxu0 0.0
    %463 = vmatprep.subr.mxu0 0.0
    %464 = vmatpush1.msra.mxu0 0.0
    %465 = vmatprep.subr.mxu0 0.0
    %466 = vmatpush1.msra.mxu0 0.0
    %467 = vmatprep.subr.mxu0 0.0
    %468 = vmatpush1.msra.mxu0 0.0
    %469 = vmatprep.subr.mxu0 0.0
    %470 = vmatpush1.msra.mxu0 0.0
    %471 = vmatprep.subr.mxu0 0.0
    %472 = vmatpush1.msra.mxu0 0.0
    %473 = vmatprep.subr.mxu0 0.0
    %474 = vmatpush1.msra.mxu0 0.0
    %475 = vmatprep.subr.mxu0 0.0
    %476 = vmatpush1.msra.mxu0 0.0
    %477 = vmatprep.subr.mxu0 0.0
    %478 = vmatpush1.msra.mxu0 0.0
    %479 = vmatprep.subr.mxu0 0.0
    %480 = vmatpush1.msra.mxu0 0.0
    %481 = vmatprep.subr.mxu0 0.0
    %482 = vmatpush1.msra.mxu0 0.0
    %483 = vmatprep.subr.mxu0 0.0
    %484 = vmatpush1.msra.mxu0 0.0
    %485 = vmatprep.subr.mxu0 0.0
    %486 = vmatpush1.msra.mxu0 0.0
    %487 = vmatprep.subr.mxu0 0.0
    %488 = vmatpush1.msra.mxu0 0.0
    %489 = vmatprep.subr.mxu0 0.0
    %490 = vmatpush1.msra.mxu0 0.0
    %491 = vmatprep.subr.mxu0 0.0
    %492 = vmatpush1.msra.mxu0 0.0
    %493 = vmatprep.subr.mxu0 0.0
    %494 = vmatpush1.msra.mxu0 0.0
    %495 = vmatprep.subr.mxu0 0.0
    %496 = vmatpush1.msra.mxu0 0.0
    %497 = vmatprep.subr.mxu0 0.0
    %498 = vmatpush1.msra.mxu0 0.0
    %499 = vmatprep.subr.mxu0 0.0
    %500 = vmatpush1.msra.mxu0 0.0
    %501 = vmatprep.subr.mxu0 0.0
    %502 = vmatpush1.msra.mxu0 0.0
    %503 = vmatprep.subr.mxu0 0.0
    %504 = vmatpush1.msra.mxu0 0.0
    %505 = vmatprep.subr.mxu0 0.0
    %506 = vmatpush1.msra.mxu0 0.0
    %507 = vmatprep.subr.mxu0 0.0
    %508 = vmatpush1.msra.mxu0 0.0
    %509 = vmatprep.subr.mxu0 0.0
    %510 = vmatpush1.msra.mxu0 0.0
    %511 = vmatprep.subr.mxu0 0.0
    %512 = vmatpush1.msra.mxu0 0.0
    %513 = vmatprep.subr.mxu0 0.0
    %514 = vmatpush1.msra.mxu0 0.0
    %515 = vmatprep.mubr.f32.mxu0 0.0
    %516 = vmatmul.mubr.f32.gmra.mrb[0].mxu0 %v449
    %v517 = vpop.f32.mrb[0].mxu0
    %v518 = vadd.f32 0.0, %v517
    %v519 = vpop.f32.mrb[0].mxu0
    %520 = vdwg.mxu0
    %v521 = vadd.f32 %v175, %v518
    %v522 = vxor.u32 %v521, 2147483648
    %v523 = vmul.f32 %v522, 1.442695
    %v524 = vpow.pop %v523
    %v525 = vadd.f32 %v524, 1.0
    %v526 = vrcp.pop %v525
    %v527 = vmul.f32 1.0, %v526
    %528 = vrot.lane.b32.xlu0 %v527, 64
    %v529 = vpop.permute.xlu0 %528
    %v530 = vadd.f32 %v518, %v217
    %v531 = vmul.f32 %v529, %v530
    %v532 = vadd.f32 %v175, %v531
    %v533 = vtanh.pop %v532
    %534 = vrot.lane.b32.xlu0 %v533, 64
    %v535 = vpop.permute.xlu0 %534
    %536 = vmatprep.subr.mxu0 0.0
    %537 = vmatpush1.msra.mxu0 %v269
    %538 = vmatprep.subr.mxu0 0.0
    %539 = vmatpush1.msra.mxu0 %v270
    %540 = vmatprep.subr.mxu0 0.0
    %541 = vmatpush1.msra.mxu0 %v271
    %542 = vmatprep.subr.mxu0 0.0
    %543 = vmatpush1.msra.mxu0 %v272
    %544 = vmatprep.subr.mxu0 0.0
    %545 = vmatpush1.msra.mxu0 %v273
    %546 = vmatprep.subr.mxu0 0.0
    %547 = vmatpush1.msra.mxu0 %v274
    %548 = vmatprep.subr.mxu0 0.0
    %549 = vmatpush1.msra.mxu0 %v275
    %550 = vmatprep.subr.mxu0 0.0
    %551 = vmatpush1.msra.mxu0 %v276
    %552 = vmatprep.subr.mxu0 0.0
    %553 = vmatpush1.msra.mxu0 %v277
    %554 = vmatprep.subr.mxu0 0.0
    %555 = vmatpush1.msra.mxu0 %v278
    %556 = vmatprep.subr.mxu0 0.0
    %557 = vmatpush1.msra.mxu0 %v279
    %558 = vmatprep.subr.mxu0 0.0
    %559 = vmatpush1.msra.mxu0 %v280
    %560 = vmatprep.subr.mxu0 0.0
    %561 = vmatpush1.msra.mxu0 %v281
    %562 = vmatprep.subr.mxu0 0.0
    %563 = vmatpush1.msra.mxu0 %v282
    %564 = vmatprep.subr.mxu0 0.0
    %565 = vmatpush1.msra.mxu0 %v283
    %566 = vmatprep.subr.mxu0 0.0
    %567 = vmatpush1.msra.mxu0 %v284
    %568 = vmatprep.subr.mxu0 0.0
    %569 = vmatpush1.msra.mxu0 0.0
    %570 = vmatprep.subr.mxu0 0.0
    %571 = vmatpush1.msra.mxu0 0.0
    %572 = vmatprep.subr.mxu0 0.0
    %573 = vmatpush1.msra.mxu0 0.0
    %574 = vmatprep.subr.mxu0 0.0
    %575 = vmatpush1.msra.mxu0 0.0
    %576 = vmatprep.subr.mxu0 0.0
    %577 = vmatpush1.msra.mxu0 0.0
    %578 = vmatprep.subr.mxu0 0.0
    %579 = vmatpush1.msra.mxu0 0.0
    %580 = vmatprep.subr.mxu0 0.0
    %581 = vmatpush1.msra.mxu0 0.0
    %582 = vmatprep.subr.mxu0 0.0
    %583 = vmatpush1.msra.mxu0 0.0
    %584 = vmatprep.subr.mxu0 0.0
    %585 = vmatpush1.msra.mxu0 0.0
    %586 = vmatprep.subr.mxu0 0.0
    %587 = vmatpush1.msra.mxu0 0.0
    %588 = vmatprep.subr.mxu0 0.0
    %589 = vmatpush1.msra.mxu0 0.0
    %590 = vmatprep.subr.mxu0 0.0
    %591 = vmatpush1.msra.mxu0 0.0
    %592 = vmatprep.subr.mxu0 0.0
    %593 = vmatpush1.msra.mxu0 0.0
    %594 = vmatprep.subr.mxu0 0.0
    %595 = vmatpush1.msra.mxu0 0.0
    %596 = vmatprep.subr.mxu0 0.0
    %597 = vmatpush1.msra.mxu0 0.0
    %598 = vmatprep.subr.mxu0 0.0
    %599 = vmatpush1.msra.mxu0 0.0
    %600 = vmatprep.mubr.f32.mxu0 0.0
    %601 = vmatmul.mubr.f32.gmra.mrb[0].mxu0 %v527
    %v602 = vpop.f32.mrb[0].mxu0
    %v603 = vadd.f32 0.0, %v602
    %v604 = vpop.f32.mrb[0].mxu0
    %605 = vdwg.mxu0
    %v606 = vsub.f32 1.0, %v603
    %v607 = vmul.f32 %v606, %v535
    %v608 = vmul.f32 %v603, %v447
    %v609 = vadd.f32 %v607, %v608
    %v611 = vsel %vm285, %v609, 0
    %613 = vmatprep.subr.mxu0 0.0
    %614 = vmatpush1.msra.mxu0 %v208
    %615 = vmatprep.subr.mxu0 0.0
    %616 = vmatpush1.msra.mxu0 %v209
    %617 = vmatprep.subr.mxu0 0.0
    %618 = vmatpush1.msra.mxu0 %v210
    %619 = vmatprep.subr.mxu0 0.0
    %620 = vmatpush1.msra.mxu0 %v211
    %621 = vmatprep.subr.mxu0 0.0
    %622 = vmatpush1.msra.mxu0 0.0
    %623 = vmatprep.subr.mxu0 0.0
    %624 = vmatpush1.msra.mxu0 0.0
    %625 = vmatprep.subr.mxu0 0.0
    %626 = vmatpush1.msra.mxu0 0.0
    %627 = vmatprep.subr.mxu0 0.0
    %628 = vmatpush1.msra.mxu0 0.0
    %629 = vmatprep.subr.mxu0 0.0
    %630 = vmatpush1.msra.mxu0 0.0
    %631 = vmatprep.subr.mxu0 0.0
    %632 = vmatpush1.msra.mxu0 0.0
    %633 = vmatprep.subr.mxu0 0.0
    %634 = vmatpush1.msra.mxu0 0.0
    %635 = vmatprep.subr.mxu0 0.0
    %636 = vmatpush1.msra.mxu0 0.0
    %637 = vmatprep.subr.mxu0 0.0
    %638 = vmatpush1.msra.mxu0 0.0
    %639 = vmatprep.subr.mxu0 0.0
    %640 = vmatpush1.msra.mxu0 0.0
    %641 = vmatprep.subr.mxu0 0.0
    %642 = vmatpush1.msra.mxu0 0.0
    %643 = vmatprep.subr.mxu0 0.0
    %644 = vmatpush1.msra.mxu0 0.0
    %645 = vmatprep.subr.mxu0 0.0
    %646 = vmatpush1.msra.mxu0 0.0
    %647 = vmatprep.subr.mxu0 0.0
    %648 = vmatpush1.msra.mxu0 0.0
    %649 = vmatprep.subr.mxu0 0.0
    %650 = vmatpush1.msra.mxu0 0.0
    %651 = vmatprep.subr.mxu0 0.0
    %652 = vmatpush1.msra.mxu0 0.0
    %653 = vmatprep.subr.mxu0 0.0
    %654 = vmatpush1.msra.mxu0 0.0
    %655 = vmatprep.subr.mxu0 0.0
    %656 = vmatpush1.msra.mxu0 0.0
    %657 = vmatprep.subr.mxu0 0.0
    %658 = vmatpush1.msra.mxu0 0.0
    %659 = vmatprep.subr.mxu0 0.0
    %660 = vmatpush1.msra.mxu0 0.0
    %661 = vmatprep.subr.mxu0 0.0
    %662 = vmatpush1.msra.mxu0 0.0
    %663 = vmatprep.subr.mxu0 0.0
    %664 = vmatpush1.msra.mxu0 0.0
    %665 = vmatprep.subr.mxu0 0.0
    %666 = vmatpush1.msra.mxu0 0.0
    %667 = vmatprep.subr.mxu0 0.0
    %668 = vmatpush1.msra.mxu0 0.0
    %669 = vmatprep.subr.mxu0 0.0
    %670 = vmatpush1.msra.mxu0 0.0
    %671 = vmatprep.subr.mxu0 0.0
    %672 = vmatpush1.msra.mxu0 0.0
    %673 = vmatprep.subr.mxu0 0.0
    %674 = vmatpush1.msra.mxu0 0.0
    %675 = vmatprep.subr.mxu0 0.0
    %676 = vmatpush1.msra.mxu0 0.0
    %677 = vmatprep.mubr.f32.mxu0 0.0
    %678 = vmatmul.mubr.f32.gmra.mrb[0].mxu0 %v611
    %v679 = vpop.f32.mrb[0].mxu0
    %v680 = vadd.f32 0.0, %v679
    %v681 = vpop.f32.mrb[0].mxu0
    %682 = vdwg.mxu0
    %v683 = vadd.f32 %v180, %v680
    %v684 = vxor.u32 %v683, 2147483648
    %v685 = vmul.f32 %v684, 1.442695
    %v686 = vpow.pop %v685
    %v687 = vadd.f32 %v686, 1.0
    %v688 = vrcp.pop %v687
    %v689 = vmul.f32 1.0, %v688
    %690 = vrot.lane.b32.xlu0 %v689, 64
    %v691 = vpop.permute.xlu0 %690
    %v692 = vadd.f32 %v680, %v217
    %v693 = vmul.f32 %v691, %v692
    %v694 = vadd.f32 %v180, %v693
    %v695 = vtanh.pop %v694
    %696 = vrot.lane.b32.xlu0 %v695, 64
    %v697 = vpop.permute.xlu0 %696
    %698 = vmatprep.subr.mxu0 0.0
    %699 = vmatpush1.msra.mxu0 %v269
    %700 = vmatprep.subr.mxu0 0.0
    %701 = vmatpush1.msra.mxu0 %v270
    %702 = vmatprep.subr.mxu0 0.0
    %703 = vmatpush1.msra.mxu0 %v271
    %704 = vmatprep.subr.mxu0 0.0
    %705 = vmatpush1.msra.mxu0 %v272
    %706 = vmatprep.subr.mxu0 0.0
    %707 = vmatpush1.msra.mxu0 %v273
    %708 = vmatprep.subr.mxu0 0.0
    %709 = vmatpush1.msra.mxu0 %v274
    %710 = vmatprep.subr.mxu0 0.0
    %711 = vmatpush1.msra.mxu0 %v275
    %712 = vmatprep.subr.mxu0 0.0
    %713 = vmatpush1.msra.mxu0 %v276
    %714 = vmatprep.subr.mxu0 0.0
    %715 = vmatpush1.msra.mxu0 %v277
    %716 = vmatprep.subr.mxu0 0.0
    %717 = vmatpush1.msra.mxu0 %v278
    %718 = vmatprep.subr.mxu0 0.0
    %719 = vmatpush1.msra.mxu0 %v279
    %720 = vmatprep.subr.mxu0 0.0
    %721 = vmatpush1.msra.mxu0 %v280
    %722 = vmatprep.subr.mxu0 0.0
    %723 = vmatpush1.msra.mxu0 %v281
    %724 = vmatprep.subr.mxu0 0.0
    %725 = vmatpush1.msra.mxu0 %v282
    %726 = vmatprep.subr.mxu0 0.0
    %727 = vmatpush1.msra.mxu0 %v283
    %728 = vmatprep.subr.mxu0 0.0
    %729 = vmatpush1.msra.mxu0 %v284
    %730 = vmatprep.subr.mxu0 0.0
    %731 = vmatpush1.msra.mxu0 0.0
    %732 = vmatprep.subr.mxu0 0.0
    %733 = vmatpush1.msra.mxu0 0.0
    %734 = vmatprep.subr.mxu0 0.0
    %735 = vmatpush1.msra.mxu0 0.0
    %736 = vmatprep.subr.mxu0 0.0
    %737 = vmatpush1.msra.mxu0 0.0
    %738 = vmatprep.subr.mxu0 0.0
    %739 = vmatpush1.msra.mxu0 0.0
    %740 = vmatprep.subr.mxu0 0.0
    %741 = vmatpush1.msra.mxu0 0.0
    %742 = vmatprep.subr.mxu0 0.0
    %743 = vmatpush1.msra.mxu0 0.0
    %744 = vmatprep.subr.mxu0 0.0
    %745 = vmatpush1.msra.mxu0 0.0
    %746 = vmatprep.subr.mxu0 0.0
    %747 = vmatpush1.msra.mxu0 0.0
    %748 = vmatprep.subr.mxu0 0.0
    %749 = vmatpush1.msra.mxu0 0.0
    %750 = vmatprep.subr.mxu0 0.0
    %751 = vmatpush1.msra.mxu0 0.0
    %752 = vmatprep.subr.mxu0 0.0
    %753 = vmatpush1.msra.mxu0 0.0
    %754 = vmatprep.subr.mxu0 0.0
    %755 = vmatpush1.msra.mxu0 0.0
    %756 = vmatprep.subr.mxu0 0.0
    %757 = vmatpush1.msra.mxu0 0.0
    %758 = vmatprep.subr.mxu0 0.0
    %759 = vmatpush1.msra.mxu0 0.0
    %760 = vmatprep.subr.mxu0 0.0
    %761 = vmatpush1.msra.mxu0 0.0
    %762 = vmatprep.mubr.f32.mxu0 0.0
    %763 = vmatmul.mubr.f32.gmra.mrb[0].mxu0 %v689
    %v764 = vpop.f32.mrb[0].mxu0
    %v765 = vadd.f32 0.0, %v764
    %v766 = vpop.f32.mrb[0].mxu0
    %767 = vdwg.mxu0
    %v768 = vsub.f32 1.0, %v765
    %v769 = vmul.f32 %v768, %v697
    %v770 = vmul.f32 %v765, %v609
    %v771 = vadd.f32 %v769, %v770
    %v773 = vsel %vm285, %v771, 0
    %775 = vmatprep.subr.mxu0 0.0
    %776 = vmatpush1.msra.mxu0 %v208
    %777 = vmatprep.subr.mxu0 0.0
    %778 = vmatpush1.msra.mxu0 %v209
    %779 = vmatprep.subr.mxu0 0.0
    %780 = vmatpush1.msra.mxu0 %v210
    %781 = vmatprep.subr.mxu0 0.0
    %782 = vmatpush1.msra.mxu0 %v211
    %783 = vmatprep.subr.mxu0 0.0
    %784 = vmatpush1.msra.mxu0 0.0
    %785 = vmatprep.subr.mxu0 0.0
    %786 = vmatpush1.msra.mxu0 0.0
    %787 = vmatprep.subr.mxu0 0.0
    %788 = vmatpush1.msra.mxu0 0.0
    %789 = vmatprep.subr.mxu0 0.0
    %790 = vmatpush1.msra.mxu0 0.0
    %791 = vmatprep.subr.mxu0 0.0
    %792 = vmatpush1.msra.mxu0 0.0
    %793 = vmatprep.subr.mxu0 0.0
    %794 = vmatpush1.msra.mxu0 0.0
    %795 = vmatprep.subr.mxu0 0.0
    %796 = vmatpush1.msra.mxu0 0.0
    %797 = vmatprep.subr.mxu0 0.0
    %798 = vmatpush1.msra.mxu0 0.0
    %799 = vmatprep.subr.mxu0 0.0
    %800 = vmatpush1.msra.mxu0 0.0
    %801 = vmatprep.subr.mxu0 0.0
    %802 = vmatpush1.msra.mxu0 0.0
    %803 = vmatprep.subr.mxu0 0.0
    %804 = vmatpush1.msra.mxu0 0.0
    %805 = vmatprep.subr.mxu0 0.0
    %806 = vmatpush1.msra.mxu0 0.0
    %807 = vmatprep.subr.mxu0 0.0
    %808 = vmatpush1.msra.mxu0 0.0
    %809 = vmatprep.subr.mxu0 0.0
    %810 = vmatpush1.msra.mxu0 0.0
    %811 = vmatprep.subr.mxu0 0.0
    %812 = vmatpush1.msra.mxu0 0.0
    %813 = vmatprep.subr.mxu0 0.0
    %814 = vmatpush1.msra.mxu0 0.0
    %815 = vmatprep.subr.mxu0 0.0
    %816 = vmatpush1.msra.mxu0 0.0
    %817 = vmatprep.subr.mxu0 0.0
    %818 = vmatpush1.msra.mxu0 0.0
    %819 = vmatprep.subr.mxu0 0.0
    %820 = vmatpush1.msra.mxu0 0.0
    %821 = vmatprep.subr.mxu0 0.0
    %822 = vmatpush1.msra.mxu0 0.0
    %823 = vmatprep.subr.mxu0 0.0
    %824 = vmatpush1.msra.mxu0 0.0
    %825 = vmatprep.subr.mxu0 0.0
    %826 = vmatpush1.msra.mxu0 0.0
    %827 = vmatprep.subr.mxu0 0.0
    %828 = vmatpush1.msra.mxu0 0.0
    %829 = vmatprep.subr.mxu0 0.0
    %830 = vmatpush1.msra.mxu0 0.0
    %831 = vmatprep.subr.mxu0 0.0
    %832 = vmatpush1.msra.mxu0 0.0
    %833 = vmatprep.subr.mxu0 0.0
    %834 = vmatpush1.msra.mxu0 0.0
    %835 = vmatprep.subr.mxu0 0.0
    %836 = vmatpush1.msra.mxu0 0.0
    %837 = vmatprep.subr.mxu0 0.0
    %838 = vmatpush1.msra.mxu0 0.0
    %839 = vmatprep.mubr.f32.mxu0 0.0
    %840 = vmatmul.mubr.f32.gmra.mrb[0].mxu0 %v773
    %v841 = vpop.f32.mrb[0].mxu0
    %v842 = vadd.f32 0.0, %v841
    %v843 = vpop.f32.mrb[0].mxu0
    %844 = vdwg.mxu0
    %v845 = vadd.f32 %v185, %v842
    %v846 = vxor.u32 %v845, 2147483648
    %v847 = vmul.f32 %v846, 1.442695
    %v848 = vpow.pop %v847
    %v849 = vadd.f32 %v848, 1.0
    %v850 = vrcp.pop %v849
    %v851 = vmul.f32 1.0, %v850
    %852 = vrot.lane.b32.xlu0 %v851, 64
    %v853 = vpop.permute.xlu0 %852
    %v854 = vadd.f32 %v842, %v217
    %v855 = vmul.f32 %v853, %v854
    %v856 = vadd.f32 %v185, %v855
    %v857 = vtanh.pop %v856
    %858 = vrot.lane.b32.xlu0 %v857, 64
    %v859 = vpop.permute.xlu0 %858
    %860 = vmatprep.subr.mxu0 0.0
    %861 = vmatpush1.msra.mxu0 %v269
    %862 = vmatprep.subr.mxu0 0.0
    %863 = vmatpush1.msra.mxu0 %v270
    %864 = vmatprep.subr.mxu0 0.0
    %865 = vmatpush1.msra.mxu0 %v271
    %866 = vmatprep.subr.mxu0 0.0
    %867 = vmatpush1.msra.mxu0 %v272
    %868 = vmatprep.subr.mxu0 0.0
    %869 = vmatpush1.msra.mxu0 %v273
    %870 = vmatprep.subr.mxu0 0.0
    %871 = vmatpush1.msra.mxu0 %v274
    %872 = vmatprep.subr.mxu0 0.0
    %873 = vmatpush1.msra.mxu0 %v275
    %874 = vmatprep.subr.mxu0 0.0
    %875 = vmatpush1.msra.mxu0 %v276
    %876 = vmatprep.subr.mxu0 0.0
    %877 = vmatpush1.msra.mxu0 %v277
    %878 = vmatprep.subr.mxu0 0.0
    %879 = vmatpush1.msra.mxu0 %v278
    %880 = vmatprep.subr.mxu0 0.0
    %881 = vmatpush1.msra.mxu0 %v279
    %882 = vmatprep.subr.mxu0 0.0
    %883 = vmatpush1.msra.mxu0 %v280
    %884 = vmatprep.subr.mxu0 0.0
    %885 = vmatpush1.msra.mxu0 %v281
    %886 = vmatprep.subr.mxu0 0.0
    %887 = vmatpush1.msra.mxu0 %v282
    %888 = vmatprep.subr.mxu0 0.0
    %889 = vmatpush1.msra.mxu0 %v283
    %890 = vmatprep.subr.mxu0 0.0
    %891 = vmatpush1.msra.mxu0 %v284
    %892 = vmatprep.subr.mxu0 0.0
    %893 = vmatpush1.msra.mxu0 0.0
    %894 = vmatprep.subr.mxu0 0.0
    %895 = vmatpush1.msra.mxu0 0.0
    %896 = vmatprep.subr.mxu0 0.0
    %897 = vmatpush1.msra.mxu0 0.0
    %898 = vmatprep.subr.mxu0 0.0
    %899 = vmatpush1.msra.mxu0 0.0
    %900 = vmatprep.subr.mxu0 0.0
    %901 = vmatpush1.msra.mxu0 0.0
    %902 = vmatprep.subr.mxu0 0.0
    %903 = vmatpush1.msra.mxu0 0.0
    %904 = vmatprep.subr.mxu0 0.0
    %905 = vmatpush1.msra.mxu0 0.0
    %906 = vmatprep.subr.mxu0 0.0
    %907 = vmatpush1.msra.mxu0 0.0
    %908 = vmatprep.subr.mxu0 0.0
    %909 = vmatpush1.msra.mxu0 0.0
    %910 = vmatprep.subr.mxu0 0.0
    %911 = vmatpush1.msra.mxu0 0.0
    %912 = vmatprep.subr.mxu0 0.0
    %913 = vmatpush1.msra.mxu0 0.0
    %914 = vmatprep.subr.mxu0 0.0
    %915 = vmatpush1.msra.mxu0 0.0
    %916 = vmatprep.subr.mxu0 0.0
    %917 = vmatpush1.msra.mxu0 0.0
    %918 = vmatprep.subr.mxu0 0.0
    %919 = vmatpush1.msra.mxu0 0.0
    %920 = vmatprep.subr.mxu0 0.0
    %921 = vmatpush1.msra.mxu0 0.0
    %922 = vmatprep.subr.mxu0 0.0
    %923 = vmatpush1.msra.mxu0 0.0
    %924 = vmatprep.mubr.f32.mxu0 0.0
    %925 = vmatmul.mubr.f32.gmra.mrb[0].mxu0 %v851
    %v926 = vpop.f32.mrb[0].mxu0
    %v927 = vadd.f32 0.0, %v926
    %v928 = vpop.f32.mrb[0].mxu0
    %929 = vdwg.mxu0
    %v930 = vsub.f32 1.0, %v927
    %v931 = vmul.f32 %v930, %v859
    %v932 = vmul.f32 %v927, %v771
    %v933 = vadd.f32 %v931, %v932
    %v935 = vsel %vm285, %v933, 0
    %937 = vmatprep.subr.mxu0 0.0
    %938 = vmatpush1.msra.mxu0 %v208
    %939 = vmatprep.subr.mxu0 0.0
    %940 = vmatpush1.msra.mxu0 %v209
    %941 = vmatprep.subr.mxu0 0.0
    %942 = vmatpush1.msra.mxu0 %v210
    %943 = vmatprep.subr.mxu0 0.0
    %944 = vmatpush1.msra.mxu0 %v211
    %945 = vmatprep.subr.mxu0 0.0
    %946 = vmatpush1.msra.mxu0 0.0
    %947 = vmatprep.subr.mxu0 0.0
    %948 = vmatpush1.msra.mxu0 0.0
    %949 = vmatprep.subr.mxu0 0.0
    %950 = vmatpush1.msra.mxu0 0.0
    %951 = vmatprep.subr.mxu0 0.0
    %952 = vmatpush1.msra.mxu0 0.0
    %953 = vmatprep.subr.mxu0 0.0
    %954 = vmatpush1.msra.mxu0 0.0
    %955 = vmatprep.subr.mxu0 0.0
    %956 = vmatpush1.msra.mxu0 0.0
    %957 = vmatprep.subr.mxu0 0.0
    %958 = vmatpush1.msra.mxu0 0.0
    %959 = vmatprep.subr.mxu0 0.0
    %960 = vmatpush1.msra.mxu0 0.0
    %961 = vmatprep.subr.mxu0 0.0
    %962 = vmatpush1.msra.mxu0 0.0
    %963 = vmatprep.subr.mxu0 0.0
    %964 = vmatpush1.msra.mxu0 0.0
    %965 = vmatprep.subr.mxu0 0.0
    %966 = vmatpush1.msra.mxu0 0.0
    %967 = vmatprep.subr.mxu0 0.0
    %968 = vmatpush1.msra.mxu0 0.0
    %969 = vmatprep.subr.mxu0 0.0
    %970 = vmatpush1.msra.mxu0 0.0
    %971 = vmatprep.subr.mxu0 0.0
    %972 = vmatpush1.msra.mxu0 0.0
    %973 = vmatprep.subr.mxu0 0.0
    %974 = vmatpush1.msra.mxu0 0.0
    %975 = vmatprep.subr.mxu0 0.0
    %976 = vmatpush1.msra.mxu0 0.0
    %977 = vmatprep.subr.mxu0 0.0
    %978 = vmatpush1.msra.mxu0 0.0
    %979 = vmatprep.subr.mxu0 0.0
    %980 = vmatpush1.msra.mxu0 0.0
    %981 = vmatprep.subr.mxu0 0.0
    %982 = vmatpush1.msra.mxu0 0.0
    %983 = vmatprep.subr.mxu0 0.0
    %984 = vmatpush1.msra.mxu0 0.0
    %985 = vmatprep.subr.mxu0 0.0
    %986 = vmatpush1.msra.mxu0 0.0
    %987 = vmatprep.subr.mxu0 0.0
    %988 = vmatpush1.msra.mxu0 0.0
    %989 = vmatprep.subr.mxu0 0.0
    %990 = vmatpush1.msra.mxu0 0.0
    %991 = vmatprep.subr.mxu0 0.0
    %992 = vmatpush1.msra.mxu0 0.0
    %993 = vmatprep.subr.mxu0 0.0
    %994 = vmatpush1.msra.mxu0 0.0
    %995 = vmatprep.subr.mxu0 0.0
    %996 = vmatpush1.msra.mxu0 0.0
    %997 = vmatprep.subr.mxu0 0.0
    %998 = vmatpush1.msra.mxu0 0.0
    %999 = vmatprep.subr.mxu0 0.0
    %1000 = vmatpush1.msra.mxu0 0.0
    %1001 = vmatprep.mubr.f32.mxu0 0.0
    %1002 = vmatmul.mubr.f32.gmra.mrb[0].mxu0 %v935
    %v1003 = vpop.f32.mrb[0].mxu0
    %v1004 = vadd.f32 0.0, %v1003
    %v1005 = vpop.f32.mrb[0].mxu0
    %1006 = vdwg.mxu0
    %v1007 = vadd.f32 %v190, %v1004
    %v1008 = vxor.u32 %v1007, 2147483648
    %v1009 = vmul.f32 %v1008, 1.442695
    %v1010 = vpow.pop %v1009
    %v1011 = vadd.f32 %v1010, 1.0
    %v1012 = vrcp.pop %v1011
    %v1013 = vmul.f32 1.0, %v1012
    %1014 = vrot.lane.b32.xlu0 %v1013, 64
    %v1015 = vpop.permute.xlu0 %1014
    %v1016 = vadd.f32 %v1004, %v217
    %v1017 = vmul.f32 %v1015, %v1016
    %v1018 = vadd.f32 %v190, %v1017
    %v1019 = vtanh.pop %v1018
    %1020 = vrot.lane.b32.xlu0 %v1019, 64
    %v1021 = vpop.permute.xlu0 %1020
    %1022 = vmatprep.subr.mxu0 0.0
    %1023 = vmatpush1.msra.mxu0 %v269
    %1024 = vmatprep.subr.mxu0 0.0
    %1025 = vmatpush1.msra.mxu0 %v270
    %1026 = vmatprep.subr.mxu0 0.0
    %1027 = vmatpush1.msra.mxu0 %v271
    %1028 = vmatprep.subr.mxu0 0.0
    %1029 = vmatpush1.msra.mxu0 %v272
    %1030 = vmatprep.subr.mxu0 0.0
    %1031 = vmatpush1.msra.mxu0 %v273
    %1032 = vmatprep.subr.mxu0 0.0
    %1033 = vmatpush1.msra.mxu0 %v274
    %1034 = vmatprep.subr.mxu0 0.0
    %1035 = vmatpush1.msra.mxu0 %v275
    %1036 = vmatprep.subr.mxu0 0.0
    %1037 = vmatpush1.msra.mxu0 %v276
    %1038 = vmatprep.subr.mxu0 0.0
    %1039 = vmatpush1.msra.mxu0 %v277
    %1040 = vmatprep.subr.mxu0 0.0
    %1041 = vmatpush1.msra.mxu0 %v278
    %1042 = vmatprep.subr.mxu0 0.0
    %1043 = vmatpush1.msra.mxu0 %v279
    %1044 = vmatprep.subr.mxu0 0.0
    %1045 = vmatpush1.msra.mxu0 %v280
    %1046 = vmatprep.subr.mxu0 0.0
    %1047 = vmatpush1.msra.mxu0 %v281
    %1048 = vmatprep.subr.mxu0 0.0
    %1049 = vmatpush1.msra.mxu0 %v282
    %1050 = vmatprep.subr.mxu0 0.0
    %1051 = vmatpush1.msra.mxu0 %v283
    %1052 = vmatprep.subr.mxu0 0.0
    %1053 = vmatpush1.msra.mxu0 %v284
    %1054 = vmatprep.subr.mxu0 0.0
    %1055 = vmatpush1.msra.mxu0 0.0
    %1056 = vmatprep.subr.mxu0 0.0
    %1057 = vmatpush1.msra.mxu0 0.0
    %1058 = vmatprep.subr.mxu0 0.0
    %1059 = vmatpush1.msra.mxu0 0.0
    %1060 = vmatprep.subr.mxu0 0.0
    %1061 = vmatpush1.msra.mxu0 0.0
    %1062 = vmatprep.subr.mxu0 0.0
    %1063 = vmatpush1.msra.mxu0 0.0
    %1064 = vmatprep.subr.mxu0 0.0
    %1065 = vmatpush1.msra.mxu0 0.0
    %1066 = vmatprep.subr.mxu0 0.0
    %1067 = vmatpush1.msra.mxu0 0.0
    %1068 = vmatprep.subr.mxu0 0.0
    %1069 = vmatpush1.msra.mxu0 0.0
    %1070 = vmatprep.subr.mxu0 0.0
    %1071 = vmatpush1.msra.mxu0 0.0
    %1072 = vmatprep.subr.mxu0 0.0
    %1073 = vmatpush1.msra.mxu0 0.0
    %1074 = vmatprep.subr.mxu0 0.0
    %1075 = vmatpush1.msra.mxu0 0.0
    %1076 = vmatprep.subr.mxu0 0.0
    %1077 = vmatpush1.msra.mxu0 0.0
    %1078 = vmatprep.subr.mxu0 0.0
    %1079 = vmatpush1.msra.mxu0 0.0
    %1080 = vmatprep.subr.mxu0 0.0
    %1081 = vmatpush1.msra.mxu0 0.0
    %1082 = vmatprep.subr.mxu0 0.0
    %1083 = vmatpush1.msra.mxu0 0.0
    %1084 = vmatprep.subr.mxu0 0.0
    %1085 = vmatpush1.msra.mxu0 0.0
    %1086 = vmatprep.mubr.f32.mxu0 0.0
    %1087 = vmatmul.mubr.f32.gmra.mrb[0].mxu0 %v1013
    %v1088 = vpop.f32.mrb[0].mxu0
    %v1089 = vadd.f32 0.0, %v1088
    %v1090 = vpop.f32.mrb[0].mxu0
    %1091 = vdwg.mxu0
    %v1092 = vsub.f32 1.0, %v1089
    %v1093 = vmul.f32 %v1092, %v1021
    %v1094 = vmul.f32 %v1089, %v933
    %v1095 = vadd.f32 %v1093, %v1094
    %v1097 = vsel %vm285, %v1095, 0
    %1099 = vmatprep.subr.mxu0 0.0
    %1100 = vmatpush1.msra.mxu0 %v208
    %1101 = vmatprep.subr.mxu0 0.0
    %1102 = vmatpush1.msra.mxu0 %v209
    %1103 = vmatprep.subr.mxu0 0.0
    %1104 = vmatpush1.msra.mxu0 %v210
    %1105 = vmatprep.subr.mxu0 0.0
    %1106 = vmatpush1.msra.mxu0 %v211
    %1107 = vmatprep.subr.mxu0 0.0
    %1108 = vmatpush1.msra.mxu0 0.0
    %1109 = vmatprep.subr.mxu0 0.0
    %1110 = vmatpush1.msra.mxu0 0.0
    %1111 = vmatprep.subr.mxu0 0.0
    %1112 = vmatpush1.msra.mxu0 0.0
    %1113 = vmatprep.subr.mxu0 0.0
    %1114 = vmatpush1.msra.mxu0 0.0
    %1115 = vmatprep.subr.mxu0 0.0
    %1116 = vmatpush1.msra.mxu0 0.0
    %1117 = vmatprep.subr.mxu0 0.0
    %1118 = vmatpush1.msra.mxu0 0.0
    %1119 = vmatprep.subr.mxu0 0.0
    %1120 = vmatpush1.msra.mxu0 0.0
    %1121 = vmatprep.subr.mxu0 0.0
    %1122 = vmatpush1.msra.mxu0 0.0
    %1123 = vmatprep.subr.mxu0 0.0
    %1124 = vmatpush1.msra.mxu0 0.0
    %1125 = vmatprep.subr.mxu0 0.0
    %1126 = vmatpush1.msra.mxu0 0.0
    %1127 = vmatprep.subr.mxu0 0.0
    %1128 = vmatpush1.msra.mxu0 0.0
    %1129 = vmatprep.subr.mxu0 0.0
    %1130 = vmatpush1.msra.mxu0 0.0
    %1131 = vmatprep.subr.mxu0 0.0
    %1132 = vmatpush1.msra.mxu0 0.0
    %1133 = vmatprep.subr.mxu0 0.0
    %1134 = vmatpush1.msra.mxu0 0.0
    %1135 = vmatprep.subr.mxu0 0.0
    %1136 = vmatpush1.msra.mxu0 0.0
    %1137 = vmatprep.subr.mxu0 0.0
    %1138 = vmatpush1.msra.mxu0 0.0
    %1139 = vmatprep.subr.mxu0 0.0
    %1140 = vmatpush1.msra.mxu0 0.0
    %1141 = vmatprep.subr.mxu0 0.0
    %1142 = vmatpush1.msra.mxu0 0.0
    %1143 = vmatprep.subr.mxu0 0.0
    %1144 = vmatpush1.msra.mxu0 0.0
    %1145 = vmatprep.subr.mxu0 0.0
    %1146 = vmatpush1.msra.mxu0 0.0
    %1147 = vmatprep.subr.mxu0 0.0
    %1148 = vmatpush1.msra.mxu0 0.0
    %1149 = vmatprep.subr.mxu0 0.0
    %1150 = vmatpush1.msra.mxu0 0.0
    %1151 = vmatprep.subr.mxu0 0.0
    %1152 = vmatpush1.msra.mxu0 0.0
    %1153 = vmatprep.subr.mxu0 0.0
    %1154 = vmatpush1.msra.mxu0 0.0
    %1155 = vmatprep.subr.mxu0 0.0
    %1156 = vmatpush1.msra.mxu0 0.0
    %1157 = vmatprep.subr.mxu0 0.0
    %1158 = vmatpush1.msra.mxu0 0.0
    %1159 = vmatprep.subr.mxu0 0.0
    %1160 = vmatpush1.msra.mxu0 0.0
    %1161 = vmatprep.subr.mxu0 0.0
    %1162 = vmatpush1.msra.mxu0 0.0
    %1163 = vmatprep.mubr.f32.mxu0 0.0
    %1164 = vmatmul.mubr.f32.gmra.mrb[0].mxu0 %v1097
    %v1165 = vpop.f32.mrb[0].mxu0
    %v1166 = vadd.f32 0.0, %v1165
    %v1167 = vpop.f32.mrb[0].mxu0
    %1168 = vdwg.mxu0
    %v1169 = vadd.f32 %v195, %v1166
    %v1170 = vxor.u32 %v1169, 2147483648
    %v1171 = vmul.f32 %v1170, 1.442695
    %v1172 = vpow.pop %v1171
    %v1173 = vadd.f32 %v1172, 1.0
    %v1174 = vrcp.pop %v1173
    %v1175 = vmul.f32 1.0, %v1174
    %1176 = vrot.lane.b32.xlu0 %v1175, 64
    %v1177 = vpop.permute.xlu0 %1176
    %v1178 = vadd.f32 %v1166, %v217
    %v1179 = vmul.f32 %v1177, %v1178
    %v1180 = vadd.f32 %v195, %v1179
    %v1181 = vtanh.pop %v1180
    %1182 = vrot.lane.b32.xlu0 %v1181, 64
    %v1183 = vpop.permute.xlu0 %1182
    %1184 = vmatprep.subr.mxu0 0.0
    %1185 = vmatpush1.msra.mxu0 %v269
    %1186 = vmatprep.subr.mxu0 0.0
    %1187 = vmatpush1.msra.mxu0 %v270
    %1188 = vmatprep.subr.mxu0 0.0
    %1189 = vmatpush1.msra.mxu0 %v271
    %1190 = vmatprep.subr.mxu0 0.0
    %1191 = vmatpush1.msra.mxu0 %v272
    %1192 = vmatprep.subr.mxu0 0.0
    %1193 = vmatpush1.msra.mxu0 %v273
    %1194 = vmatprep.subr.mxu0 0.0
    %1195 = vmatpush1.msra.mxu0 %v274
    %1196 = vmatprep.subr.mxu0 0.0
    %1197 = vmatpush1.msra.mxu0 %v275
    %1198 = vmatprep.subr.mxu0 0.0
    %1199 = vmatpush1.msra.mxu0 %v276
    %1200 = vmatprep.subr.mxu0 0.0
    %1201 = vmatpush1.msra.mxu0 %v277
    %1202 = vmatprep.subr.mxu0 0.0
    %1203 = vmatpush1.msra.mxu0 %v278
    %1204 = vmatprep.subr.mxu0 0.0
    %1205 = vmatpush1.msra.mxu0 %v279
    %1206 = vmatprep.subr.mxu0 0.0
    %1207 = vmatpush1.msra.mxu0 %v280
    %1208 = vmatprep.subr.mxu0 0.0
    %1209 = vmatpush1.msra.mxu0 %v281
    %1210 = vmatprep.subr.mxu0 0.0
    %1211 = vmatpush1.msra.mxu0 %v282
    %1212 = vmatprep.subr.mxu0 0.0
    %1213 = vmatpush1.msra.mxu0 %v283
    %1214 = vmatprep.subr.mxu0 0.0
    %1215 = vmatpush1.msra.mxu0 %v284
    %1216 = vmatprep.subr.mxu0 0.0
    %1217 = vmatpush1.msra.mxu0 0.0
    %1218 = vmatprep.subr.mxu0 0.0
    %1219 = vmatpush1.msra.mxu0 0.0
    %1220 = vmatprep.subr.mxu0 0.0
    %1221 = vmatpush1.msra.mxu0 0.0
    %1222 = vmatprep.subr.mxu0 0.0
    %1223 = vmatpush1.msra.mxu0 0.0
    %1224 = vmatprep.subr.mxu0 0.0
    %1225 = vmatpush1.msra.mxu0 0.0
    %1226 = vmatprep.subr.mxu0 0.0
    %1227 = vmatpush1.msra.mxu0 0.0
    %1228 = vmatprep.subr.mxu0 0.0
    %1229 = vmatpush1.msra.mxu0 0.0
    %1230 = vmatprep.subr.mxu0 0.0
    %1231 = vmatpush1.msra.mxu0 0.0
    %1232 = vmatprep.subr.mxu0 0.0
    %1233 = vmatpush1.msra.mxu0 0.0
    %1234 = vmatprep.subr.mxu0 0.0
    %1235 = vmatpush1.msra.mxu0 0.0
    %1236 = vmatprep.subr.mxu0 0.0
    %1237 = vmatpush1.msra.mxu0 0.0
    %1238 = vmatprep.subr.mxu0 0.0
    %1239 = vmatpush1.msra.mxu0 0.0
    %1240 = vmatprep.subr.mxu0 0.0
    %1241 = vmatpush1.msra.mxu0 0.0
    %1242 = vmatprep.subr.mxu0 0.0
    %1243 = vmatpush1.msra.mxu0 0.0
    %1244 = vmatprep.subr.mxu0 0.0
    %1245 = vmatpush1.msra.mxu0 0.0
    %1246 = vmatprep.subr.mxu0 0.0
    %1247 = vmatpush1.msra.mxu0 0.0
    %1248 = vmatprep.mubr.f32.mxu0 0.0
    %1249 = vmatmul.mubr.f32.gmra.mrb[0].mxu0 %v1175
    %v1250 = vpop.f32.mrb[0].mxu0
    %v1251 = vadd.f32 0.0, %v1250
    %v1252 = vpop.f32.mrb[0].mxu0
    %1253 = vdwg.mxu0
    %v1254 = vsub.f32 1.0, %v1251
    %v1255 = vmul.f32 %v1254, %v1183
    %v1256 = vmul.f32 %v1251, %v1095
    %v1257 = vadd.f32 %v1255, %v1256
    %v1259 = vsel %vm285, %v1257, 0
    %1261 = vmatprep.subr.mxu0 0.0
    %1262 = vmatpush1.msra.mxu0 %v208
    %1263 = vmatprep.subr.mxu0 0.0
    %1264 = vmatpush1.msra.mxu0 %v209
    %1265 = vmatprep.subr.mxu0 0.0
    %1266 = vmatpush1.msra.mxu0 %v210
    %1267 = vmatprep.subr.mxu0 0.0
    %1268 = vmatpush1.msra.mxu0 %v211
    %1269 = vmatprep.subr.mxu0 0.0
    %1270 = vmatpush1.msra.mxu0 0.0
    %1271 = vmatprep.subr.mxu0 0.0
    %1272 = vmatpush1.msra.mxu0 0.0
    %1273 = vmatprep.subr.mxu0 0.0
    %1274 = vmatpush1.msra.mxu0 0.0
    %1275 = vmatprep.subr.mxu0 0.0
    %1276 = vmatpush1.msra.mxu0 0.0
    %1277 = vmatprep.subr.mxu0 0.0
    %1278 = vmatpush1.msra.mxu0 0.0
    %1279 = vmatprep.subr.mxu0 0.0
    %1280 = vmatpush1.msra.mxu0 0.0
    %1281 = vmatprep.subr.mxu0 0.0
    %1282 = vmatpush1.msra.mxu0 0.0
    %1283 = vmatprep.subr.mxu0 0.0
    %1284 = vmatpush1.msra.mxu0 0.0
    %1285 = vmatprep.subr.mxu0 0.0
    %1286 = vmatpush1.msra.mxu0 0.0
    %1287 = vmatprep.subr.mxu0 0.0
    %1288 = vmatpush1.msra.mxu0 0.0
    %1289 = vmatprep.subr.mxu0 0.0
    %1290 = vmatpush1.msra.mxu0 0.0
    %1291 = vmatprep.subr.mxu0 0.0
    %1292 = vmatpush1.msra.mxu0 0.0
    %1293 = vmatprep.subr.mxu0 0.0
    %1294 = vmatpush1.msra.mxu0 0.0
    %1295 = vmatprep.subr.mxu0 0.0
    %1296 = vmatpush1.msra.mxu0 0.0
    %1297 = vmatprep.subr.mxu0 0.0
    %1298 = vmatpush1.msra.mxu0 0.0
    %1299 = vmatprep.subr.mxu0 0.0
    %1300 = vmatpush1.msra.mxu0 0.0
    %1301 = vmatprep.subr.mxu0 0.0
    %1302 = vmatpush1.msra.mxu0 0.0
    %1303 = vmatprep.subr.mxu0 0.0
    %1304 = vmatpush1.msra.mxu0 0.0
    %1305 = vmatprep.subr.mxu0 0.0
    %1306 = vmatpush1.msra.mxu0 0.0
    %1307 = vmatprep.subr.mxu0 0.0
    %1308 = vmatpush1.msra.mxu0 0.0
    %1309 = vmatprep.subr.mxu0 0.0
    %1310 = vmatpush1.msra.mxu0 0.0
    %1311 = vmatprep.subr.mxu0 0.0
    %1312 = vmatpush1.msra.mxu0 0.0
    %1313 = vmatprep.subr.mxu0 0.0
    %1314 = vmatpush1.msra.mxu0 0.0
    %1315 = vmatprep.subr.mxu0 0.0
    %1316 = vmatpush1.msra.mxu0 0.0
    %1317 = vmatprep.subr.mxu0 0.0
    %1318 = vmatpush1.msra.mxu0 0.0
    %1319 = vmatprep.subr.mxu0 0.0
    %1320 = vmatpush1.msra.mxu0 0.0
    %1321 = vmatprep.subr.mxu0 0.0
    %1322 = vmatpush1.msra.mxu0 0.0
    %1323 = vmatprep.subr.mxu0 0.0
    %1324 = vmatpush1.msra.mxu0 0.0
    %1325 = vmatprep.mubr.f32.mxu0 0.0
    %1326 = vmatmul.mubr.f32.gmra.mrb[0].mxu0 %v1259
    %v1327 = vpop.f32.mrb[0].mxu0
    %v1328 = vadd.f32 0.0, %v1327
    %v1329 = vpop.f32.mrb[0].mxu0
    %1330 = vdwg.mxu0
    %v1331 = vadd.f32 %v200, %v1328
    %v1332 = vxor.u32 %v1331, 2147483648
    %v1333 = vmul.f32 %v1332, 1.442695
    %v1334 = vpow.pop %v1333
    %v1335 = vadd.f32 %v1334, 1.0
    %v1336 = vrcp.pop %v1335
    %v1337 = vmul.f32 1.0, %v1336
    %1338 = vrot.lane.b32.xlu0 %v1337, 64
    %v1339 = vpop.permute.xlu0 %1338
    %v1340 = vadd.f32 %v1328, %v217
    %v1341 = vmul.f32 %v1339, %v1340
    %v1342 = vadd.f32 %v200, %v1341
    %v1343 = vtanh.pop %v1342
    %1344 = vrot.lane.b32.xlu0 %v1343, 64
    %v1345 = vpop.permute.xlu0 %1344
    %1346 = vmatprep.subr.mxu0 0.0
    %1347 = vmatpush1.msra.mxu0 %v269
    %1348 = vmatprep.subr.mxu0 0.0
    %1349 = vmatpush1.msra.mxu0 %v270
    %1350 = vmatprep.subr.mxu0 0.0
    %1351 = vmatpush1.msra.mxu0 %v271
    %1352 = vmatprep.subr.mxu0 0.0
    %1353 = vmatpush1.msra.mxu0 %v272
    %1354 = vmatprep.subr.mxu0 0.0
    %1355 = vmatpush1.msra.mxu0 %v273
    %1356 = vmatprep.subr.mxu0 0.0
    %1357 = vmatpush1.msra.mxu0 %v274
    %1358 = vmatprep.subr.mxu0 0.0
    %1359 = vmatpush1.msra.mxu0 %v275
    %1360 = vmatprep.subr.mxu0 0.0
    %1361 = vmatpush1.msra.mxu0 %v276
    %1362 = vmatprep.subr.mxu0 0.0
    %1363 = vmatpush1.msra.mxu0 %v277
    %1364 = vmatprep.subr.mxu0 0.0
    %1365 = vmatpush1.msra.mxu0 %v278
    %1366 = vmatprep.subr.mxu0 0.0
    %1367 = vmatpush1.msra.mxu0 %v279
    %1368 = vmatprep.subr.mxu0 0.0
    %1369 = vmatpush1.msra.mxu0 %v280
    %1370 = vmatprep.subr.mxu0 0.0
    %1371 = vmatpush1.msra.mxu0 %v281
    %1372 = vmatprep.subr.mxu0 0.0
    %1373 = vmatpush1.msra.mxu0 %v282
    %1374 = vmatprep.subr.mxu0 0.0
    %1375 = vmatpush1.msra.mxu0 %v283
    %1376 = vmatprep.subr.mxu0 0.0
    %1377 = vmatpush1.msra.mxu0 %v284
    %1378 = vmatprep.subr.mxu0 0.0
    %1379 = vmatpush1.msra.mxu0 0.0
    %1380 = vmatprep.subr.mxu0 0.0
    %1381 = vmatpush1.msra.mxu0 0.0
    %1382 = vmatprep.subr.mxu0 0.0
    %1383 = vmatpush1.msra.mxu0 0.0
    %1384 = vmatprep.subr.mxu0 0.0
    %1385 = vmatpush1.msra.mxu0 0.0
    %1386 = vmatprep.subr.mxu0 0.0
    %1387 = vmatpush1.msra.mxu0 0.0
    %1388 = vmatprep.subr.mxu0 0.0
    %1389 = vmatpush1.msra.mxu0 0.0
    %1390 = vmatprep.subr.mxu0 0.0
    %1391 = vmatpush1.msra.mxu0 0.0
    %1392 = vmatprep.subr.mxu0 0.0
    %1393 = vmatpush1.msra.mxu0 0.0
    %1394 = vmatprep.subr.mxu0 0.0
    %1395 = vmatpush1.msra.mxu0 0.0
    %1396 = vmatprep.subr.mxu0 0.0
    %1397 = vmatpush1.msra.mxu0 0.0
    %1398 = vmatprep.subr.mxu0 0.0
    %1399 = vmatpush1.msra.mxu0 0.0
    %1400 = vmatprep.subr.mxu0 0.0
    %1401 = vmatpush1.msra.mxu0 0.0
    %1402 = vmatprep.subr.mxu0 0.0
    %1403 = vmatpush1.msra.mxu0 0.0
    %1404 = vmatprep.subr.mxu0 0.0
    %1405 = vmatpush1.msra.mxu0 0.0
    %1406 = vmatprep.subr.mxu0 0.0
    %1407 = vmatpush1.msra.mxu0 0.0
    %1408 = vmatprep.subr.mxu0 0.0
    %1409 = vmatpush1.msra.mxu0 0.0
    %1410 = vmatprep.mubr.f32.mxu0 0.0
    %1411 = vmatmul.mubr.f32.gmra.mrb[0].mxu0 %v1337
    %v1412 = vpop.f32.mrb[0].mxu0
    %v1413 = vadd.f32 0.0, %v1412
    %v1414 = vpop.f32.mrb[0].mxu0
    %1415 = vdwg.mxu0
    %v1416 = vsub.f32 1.0, %v1413
    %v1417 = vmul.f32 %v1416, %v1345
    %v1418 = vmul.f32 %v1413, %v1257
    %v1419 = vadd.f32 %v1417, %v1418
    %v1421 = vsel %vm285, %v1419, 0
    %1423 = vmatprep.subr.mxu0 0.0
    %1424 = vmatpush1.msra.mxu0 %v208
    %1425 = vmatprep.subr.mxu0 0.0
    %1426 = vmatpush1.msra.mxu0 %v209
    %1427 = vmatprep.subr.mxu0 0.0
    %1428 = vmatpush1.msra.mxu0 %v210
    %1429 = vmatprep.subr.mxu0 0.0
    %1430 = vmatpush1.msra.mxu0 %v211
    %1431 = vmatprep.subr.mxu0 0.0
    %1432 = vmatpush1.msra.mxu0 0.0
    %1433 = vmatprep.subr.mxu0 0.0
    %1434 = vmatpush1.msra.mxu0 0.0
    %1435 = vmatprep.subr.mxu0 0.0
    %1436 = vmatpush1.msra.mxu0 0.0
    %1437 = vmatprep.subr.mxu0 0.0
    %1438 = vmatpush1.msra.mxu0 0.0
    %1439 = vmatprep.subr.mxu0 0.0
    %1440 = vmatpush1.msra.mxu0 0.0
    %1441 = vmatprep.subr.mxu0 0.0
    %1442 = vmatpush1.msra.mxu0 0.0
    %1443 = vmatprep.subr.mxu0 0.0
    %1444 = vmatpush1.msra.mxu0 0.0
    %1445 = vmatprep.subr.mxu0 0.0
    %1446 = vmatpush1.msra.mxu0 0.0
    %1447 = vmatprep.subr.mxu0 0.0
    %1448 = vmatpush1.msra.mxu0 0.0
    %1449 = vmatprep.subr.mxu0 0.0
    %1450 = vmatpush1.msra.mxu0 0.0
    %1451 = vmatprep.subr.mxu0 0.0
    %1452 = vmatpush1.msra.mxu0 0.0
    %1453 = vmatprep.subr.mxu0 0.0
    %1454 = vmatpush1.msra.mxu0 0.0
    %1455 = vmatprep.subr.mxu0 0.0
    %1456 = vmatpush1.msra.mxu0 0.0
    %1457 = vmatprep.subr.mxu0 0.0
    %1458 = vmatpush1.msra.mxu0 0.0
    %1459 = vmatprep.subr.mxu0 0.0
    %1460 = vmatpush1.msra.mxu0 0.0
    %1461 = vmatprep.subr.mxu0 0.0
    %1462 = vmatpush1.msra.mxu0 0.0
    %1463 = vmatprep.subr.mxu0 0.0
    %1464 = vmatpush1.msra.mxu0 0.0
    %1465 = vmatprep.subr.mxu0 0.0
    %1466 = vmatpush1.msra.mxu0 0.0
    %1467 = vmatprep.subr.mxu0 0.0
    %1468 = vmatpush1.msra.mxu0 0.0
    %1469 = vmatprep.subr.mxu0 0.0
    %1470 = vmatpush1.msra.mxu0 0.0
    %1471 = vmatprep.subr.mxu0 0.0
    %1472 = vmatpush1.msra.mxu0 0.0
    %1473 = vmatprep.subr.mxu0 0.0
    %1474 = vmatpush1.msra.mxu0 0.0
    %1475 = vmatprep.subr.mxu0 0.0
    %1476 = vmatpush1.msra.mxu0 0.0
    %1477 = vmatprep.subr.mxu0 0.0
    %1478 = vmatpush1.msra.mxu0 0.0
    %1479 = vmatprep.subr.mxu0 0.0
    %1480 = vmatpush1.msra.mxu0 0.0
    %1481 = vmatprep.subr.mxu0 0.0
    %1482 = vmatpush1.msra.mxu0 0.0
    %1483 = vmatprep.subr.mxu0 0.0
    %1484 = vmatpush1.msra.mxu0 0.0
    %1485 = vmatprep.subr.mxu0 0.0
    %1486 = vmatpush1.msra.mxu0 0.0
    %1487 = vmatprep.mubr.f32.mxu0 0.0
    %1488 = vmatmul.mubr.f32.gmra.mrb[0].mxu0 %v1421
    %v1489 = vpop.f32.mrb[0].mxu0
    %v1490 = vadd.f32 0.0, %v1489
    %v1491 = vpop.f32.mrb[0].mxu0
    %1492 = vdwg.mxu0
    %v1493 = vadd.f32 %v205, %v1490
    %v1494 = vxor.u32 %v1493, 2147483648
    %v1495 = vmul.f32 %v1494, 1.442695
    %v1496 = vpow.pop %v1495
    %v1497 = vadd.f32 %v1496, 1.0
    %v1498 = vrcp.pop %v1497
    %v1499 = vmul.f32 1.0, %v1498
    %1500 = vrot.lane.b32.xlu0 %v1499, 64
    %v1501 = vpop.permute.xlu0 %1500
    %v1502 = vadd.f32 %v1490, %v217
    %v1503 = vmul.f32 %v1501, %v1502
    %v1504 = vadd.f32 %v205, %v1503
    %v1505 = vtanh.pop %v1504
    %1506 = vrot.lane.b32.xlu0 %v1505, 64
    %v1507 = vpop.permute.xlu0 %1506
    %1508 = vmatprep.subr.mxu0 0.0
    %1509 = vmatpush1.msra.mxu0 %v269
    %1510 = vmatprep.subr.mxu0 0.0
    %1511 = vmatpush1.msra.mxu0 %v270
    %1512 = vmatprep.subr.mxu0 0.0
    %1513 = vmatpush1.msra.mxu0 %v271
    %1514 = vmatprep.subr.mxu0 0.0
    %1515 = vmatpush1.msra.mxu0 %v272
    %1516 = vmatprep.subr.mxu0 0.0
    %1517 = vmatpush1.msra.mxu0 %v273
    %1518 = vmatprep.subr.mxu0 0.0
    %1519 = vmatpush1.msra.mxu0 %v274
    %1520 = vmatprep.subr.mxu0 0.0
    %1521 = vmatpush1.msra.mxu0 %v275
    %1522 = vmatprep.subr.mxu0 0.0
    %1523 = vmatpush1.msra.mxu0 %v276
    %1524 = vmatprep.subr.mxu0 0.0
    %1525 = vmatpush1.msra.mxu0 %v277
    %1526 = vmatprep.subr.mxu0 0.0
    %1527 = vmatpush1.msra.mxu0 %v278
    %1528 = vmatprep.subr.mxu0 0.0
    %1529 = vmatpush1.msra.mxu0 %v279
    %1530 = vmatprep.subr.mxu0 0.0
    %1531 = vmatpush1.msra.mxu0 %v280
    %1532 = vmatprep.subr.mxu0 0.0
    %1533 = vmatpush1.msra.mxu0 %v281
    %1534 = vmatprep.subr.mxu0 0.0
    %1535 = vmatpush1.msra.mxu0 %v282
    %1536 = vmatprep.subr.mxu0 0.0
    %1537 = vmatpush1.msra.mxu0 %v283
    %1538 = vmatprep.subr.mxu0 0.0
    %1539 = vmatpush1.msra.mxu0 %v284
    %1540 = vmatprep.subr.mxu0 0.0
    %1541 = vmatpush1.msra.mxu0 0.0
    %1542 = vmatprep.subr.mxu0 0.0
    %1543 = vmatpush1.msra.mxu0 0.0
    %1544 = vmatprep.subr.mxu0 0.0
    %1545 = vmatpush1.msra.mxu0 0.0
    %1546 = vmatprep.subr.mxu0 0.0
    %1547 = vmatpush1.msra.mxu0 0.0
    %1548 = vmatprep.subr.mxu0 0.0
    %1549 = vmatpush1.msra.mxu0 0.0
    %1550 = vmatprep.subr.mxu0 0.0
    %1551 = vmatpush1.msra.mxu0 0.0
    %1552 = vmatprep.subr.mxu0 0.0
    %1553 = vmatpush1.msra.mxu0 0.0
    %1554 = vmatprep.subr.mxu0 0.0
    %1555 = vmatpush1.msra.mxu0 0.0
    %1556 = vmatprep.subr.mxu0 0.0
    %1557 = vmatpush1.msra.mxu0 0.0
    %1558 = vmatprep.subr.mxu0 0.0
    %1559 = vmatpush1.msra.mxu0 0.0
    %1560 = vmatprep.subr.mxu0 0.0
    %1561 = vmatpush1.msra.mxu0 0.0
    %1562 = vmatprep.subr.mxu0 0.0
    %1563 = vmatpush1.msra.mxu0 0.0
    %1564 = vmatprep.subr.mxu0 0.0
    %1565 = vmatpush1.msra.mxu0 0.0
    %1566 = vmatprep.subr.mxu0 0.0
    %1567 = vmatpush1.msra.mxu0 0.0
    %1568 = vmatprep.subr.mxu0 0.0
    %1569 = vmatpush1.msra.mxu0 0.0
    %1570 = vmatprep.subr.mxu0 0.0
    %1571 = vmatpush1.msra.mxu0 0.0
    %1572 = vmatprep.mubr.f32.mxu0 0.0
    %1573 = vmatmul.mubr.f32.gmra.mrb[0].mxu0 %v1499
    %v1574 = vpop.f32.mrb[0].mxu0
    %v1575 = vadd.f32 0.0, %v1574
    %v1576 = vpop.f32.mrb[0].mxu0
    %1577 = vdwg.mxu0
    %v1578 = vsub.f32 1.0, %v1575
    %v1579 = vmul.f32 %v1578, %v1507
    %v1580 = vmul.f32 %v1575, %v1419
    %v1581 = vadd.f32 %v1579, %v1580
    %1582 = vst.msk [vmem:[#allocation2] sm:$0xff] %vm285, %v1581
    // Predicated region
    $region18: #{tpu_custom_call.1} parent=1 // pred_check
      _
    $region19: #{tpu_custom_call.1} parent=1 // pred_check_branch
      %1584 = sbr.rel (0) target = $region21
    $region20: #{tpu_custom_call.1} parent=1 // pred_region
      %s1586 = ssub.s32 128, 128
      %1587 = vsyncadd [#allocation3], %s1586
      %s1589 = sshll.u32 [#allocation2], 4
      %s1590 = int_to_ptr.vmem [resolvable:$true] %s1589
      %1592 = dma.vmem_to_hbm [thread:$0]  %s1590, 128, %s4, [#allocation3]
    $region21: #{tpu_custom_call.1} parent=1 // pred_fallthru
      _
    // Predicated region
    $region22: #{tpu_custom_call.1} parent=1 // pred_check
      _
    $region23: #{tpu_custom_call.1} parent=1 // pred_check_branch
      %1594 = sbr.rel (0) target = $region25
    $region24: #{tpu_custom_call.1} parent=1 // pred_region
      %1595 = dma.done [#allocation3], 128
    $region25: #{tpu_custom_call.1} parent=1 // pred_fallthru
      _
    %1596 = vsyncpa [#allocation3], 1

</llo_original>
